<compile_context>
chip_gen: v6e
topology: v6e:2x2x1
jax: 0.10.0
libtpu: 0.0.40
codegen_flags: <defaults>
</compile_context>

<pallas_src>
import functools

import numpy as np
import jax
import jax.numpy as jnp
from jax.experimental import pallas as pl
from jax.experimental.pallas import tpu as pltpu


# ----------------------------------------------------------------------------
# Fused kernel: one image per grid step.
# ----------------------------------------------------------------------------
def _disc_fused_kernel(xph_ref, w1b_ref, b1t_ref, w2b_ref, b2t_ref, w3p_ref,
                       b3_ref, wl1_ref, bl1_ref, wl2_ref, bl2_ref,
                       out_ref, feat_ref, *, oh1, oh2, ow2, oc2, K):
    xp = xph_ref[0]                                   # (2, H//2, W*C) f32

    # ---- conv1 (4x4, stride 2) + ReLU -------------------------------------
    # Sum over kernel rows ki of a banded matmul against the stride-2 row
    # phase (ki % 2) of the input; output is (OH1, OW1*64) lane-dense.
    a1 = jnp.dot(xp[0, 0:oh1, :].astype(jnp.bfloat16), w1b_ref[0],
                 preferred_element_type=jnp.float32)
    for ki in range(1, K):
        p, q = ki % 2, ki // 2
        a1 = a1 + jnp.dot(xp[p, q:q + oh1, :].astype(jnp.bfloat16),
                          w1b_ref[ki], preferred_element_type=jnp.float32)
    a1 = jnp.maximum(a1 + b1t_ref[...], 0.0)          # (7, 448) f32

    # ---- conv2 (4x4, stride 1) + ReLU -------------------------------------
    a2 = jnp.dot(a1[0:oh2, :].astype(jnp.bfloat16), w2b_ref[0],
                 preferred_element_type=jnp.float32)
    for ki in range(1, K):
        a2 = a2 + jnp.dot(a1[ki:ki + oh2, :].astype(jnp.bfloat16),
                          w2b_ref[ki], preferred_element_type=jnp.float32)
    a2 = jnp.maximum(a2 + b2t_ref[...], 0.0)          # (4, 128) f32

    # ---- conv3 (4x4 over the 4x4 map -> 1x1 spatial) + ReLU ----------------
    w3 = w3p_ref[...]
    rk = ow2 * oc2                                    # rows of w3p per kernel row
    f = jnp.dot(a2[0:1, :].astype(jnp.bfloat16), w3[0:rk, :],
                preferred_element_type=jnp.float32)
    for ki in range(1, K):
        f = f + jnp.dot(a2[ki:ki + 1, :].astype(jnp.bfloat16),
                        w3[ki * rk:(ki + 1) * rk, :],
                        preferred_element_type=jnp.float32)
    f = jnp.maximum(f + b3_ref[...], 0.0)             # (1, 16) f32
    feat_ref[0] = f.astype(feat_ref.dtype)            # returned conv features

    # ---- Dropout (identity, eval) -> Linear -> ReLU ------------------------
    h = jnp.dot(f.astype(jnp.bfloat16), wl1_ref[...],
                preferred_element_type=jnp.float32)
    h = jnp.maximum(h + bl1_ref[...], 0.0)            # (1, h_dim) f32

    # ---- Dropout (identity) -> Linear(h_dim -> 1) -> Sigmoid ---------------
    # N=1 matvec done as a lane reduce on the VPU; sigmoid goes to the EUP.
    logit = jnp.sum(h * wl2_ref[...].astype(jnp.float32), axis=1, keepdims=True)
    out_ref[0] = jax.nn.sigmoid(logit + bl2_ref[...]).astype(out_ref.dtype)


# ----------------------------------------------------------------------------
# One-time weight packing into banded-matmul layout (done at init, not per call)
# ----------------------------------------------------------------------------
def pack_params(raw, x_dim):
    C, H, W = x_dim
    OH1, OW1 = (H - 4) // 2 + 1, (W - 4) // 2 + 1
    OH2, OW2 = OH1 - 3, OW1 - 3
    OH3, OW3 = OH2 - 3, OW2 - 3
    assert OH3 == 1 and OW3 == 1, "fused kernel assumes conv3 collapses to 1x1"
    OC1, OC2, OC3 = 64, 32, 16
    K = 4

    w1 = np.asarray(raw["c1_w"], np.float32)          # (64, C, 4, 4)
    w2 = np.asarray(raw["c2_w"], np.float32)          # (32, 64, 4, 4)
    w3 = np.asarray(raw["c3_w"], np.float32)          # (16, 32, 4, 4)

    # conv1 band matrices (stride 2): w1b[ki, w_in*C + c, ow*OC1 + f]
    #   = w1[f, c, ki, kj] with w_in = 2*ow + kj.
    w1b = np.zeros((K, W * C, OW1 * OC1), np.float32)
    for ki in range(K):
        for ow in range(OW1):
            for kj in range(K):
                w_in = 2 * ow + kj
                w1b[ki, w_in * C:(w_in + 1) * C,
                    ow * OC1:(ow + 1) * OC1] = w1[:, :, ki, kj].T

    # conv2 band matrices (stride 1): w2b[ki, w_in*OC1 + c, ow*OC2 + f]
    #   = w2[f, c, ki, kj] with w_in = ow + kj.
    w2b = np.zeros((K, OW1 * OC1, OW2 * OC2), np.float32)
    for ki in range(K):
        for ow in range(OW2):
            for kj in range(K):
                w_in = ow + kj
                w2b[ki, w_in * OC1:(w_in + 1) * OC1,
                    ow * OC2:(ow + 1) * OC2] = w2[:, :, ki, kj].T

    # conv3 packed (kh, kw, c) x f; rows line up with a2's (row=kh, col=kw*OC2+c).
    w3p = np.transpose(w3, (2, 3, 1, 0)).reshape(K * K * OC2, OC3)

    f32 = np.float32
    return {
        "w1b": jnp.asarray(w1b, jnp.bfloat16),
        "b1t": jnp.asarray(np.tile(np.asarray(raw["c1_b"], f32), OW1)[None, :]),
        "w2b": jnp.asarray(w2b, jnp.bfloat16),
        "b2t": jnp.asarray(np.tile(np.asarray(raw["c2_b"], f32), OW2)[None, :]),
        "w3p": jnp.asarray(w3p, jnp.bfloat16),
        "b3":  jnp.asarray(np.asarray(raw["c3_b"], f32)[None, :]),
        "wl1": jnp.asarray(np.asarray(raw["l1_w"], f32).T, jnp.bfloat16),
        "bl1": jnp.asarray(np.asarray(raw["l1_b"], f32)[None, :]),
        "wl2": jnp.asarray(np.asarray(raw["l2_w"], f32), jnp.bfloat16),
        "bl2": jnp.asarray(np.asarray(raw["l2_b"], f32)[None, :]),
    }


def init_discriminator_params(key, x_dim, h_dim):
    """x_dim = (channels, H, W). Returns (raw torch-layout, packed, cout_shape)."""
    channels, H, W = x_dim
    h1, w1 = (H - 4) // 2 + 1, (W - 4) // 2 + 1
    h2, w2 = h1 - 3, w1 - 3
    h3, w3 = h2 - 3, w2 - 3
    cout_shape = 16 * h3 * w3

    ks = jax.random.split(key, 10)
    s = 0.05
    raw = {
        "c1_w": jax.random.normal(ks[0], (64, channels, 4, 4), jnp.float32) * s,
        "c1_b": jax.random.normal(ks[1], (64,), jnp.float32) * s,
        "c2_w": jax.random.normal(ks[2], (32, 64, 4, 4), jnp.float32) * s,
        "c2_b": jax.random.normal(ks[3], (32,), jnp.float32) * s,
        "c3_w": jax.random.normal(ks[4], (16, 32, 4, 4), jnp.float32) * s,
        "c3_b": jax.random.normal(ks[5], (16,), jnp.float32) * s,
        # torch nn.Linear layout: (out_features, in_features)
        "l1_w": jax.random.normal(ks[6], (h_dim, cout_shape), jnp.float32) * s,
        "l1_b": jax.random.normal(ks[7], (h_dim,), jnp.float32) * s,
        "l2_w": jax.random.normal(ks[8], (1, h_dim), jnp.float32) * s,
        "l2_b": jax.random.normal(ks[9], (1,), jnp.float32) * s,
    }
    return raw, pack_params(raw, x_dim), cout_shape


# ----------------------------------------------------------------------------
# Forward: one fused pallas_call
# ----------------------------------------------------------------------------
def discriminator_forward(params, x_nchw):
    """Returns (out, conv_features) like the PyTorch forward (eval mode)."""
    N, C, H, W = x_nchw.shape
    OC1, OC2, OC3 = 64, 32, 16
    OH1 = (H - 4) // 2 + 1
    OW1 = params["w1b"].shape[2] // OC1
    OH2 = OH1 - 3
    OW2 = params["w2b"].shape[2] // OC2
    h_dim = params["wl1"].shape[1]
    assert params["w1b"].shape[1] == W * C and OW1 == (W - 4) // 2 + 1
    assert OH2 == 4 and OW2 == 4          # conv3 collapses to 1x1 spatial

    # Only layout glue outside the kernel: NCHW -> NHWC -> stride-2 row-phase
    # split (N, 2, H//2, W*C). Pure reshape/transpose, no data duplication.
    x = jnp.transpose(x_nchw, (0, 2, 3, 1))                       # NHWC
    xph = jnp.transpose(x.reshape(N, H // 2, 2, W * C), (0, 2, 1, 3))

    kernel = functools.partial(_disc_fused_kernel,
                               oh1=OH1, oh2=OH2, ow2=OW2, oc2=OC2, K=4)

    weight_bytes = int(sum(int(p.size) * p.dtype.itemsize for p in params.values()))
    flops_per_img = 2 * (4 * OH1 * (W * C) * (OW1 * OC1)
                         + 4 * OH2 * (OW1 * OC1) * (OW2 * OC2)
                         + 4 * (OW2 * OC2) * OC3
                         + OC3 * h_dim + h_dim)
    cost = pl.CostEstimate(
        flops=N * flops_per_img, transcendentals=N,
        bytes_accessed=weight_bytes + int(xph.size) * xph.dtype.itemsize
        + N * (1 + OC3) * 4)

    out3, feat3 = pl.pallas_call(
        kernel,
        out_shape=(jax.ShapeDtypeStruct((N, 1, 1), jnp.float32),
                   jax.ShapeDtypeStruct((N, 1, OC3), jnp.float32)),
        grid=(N,),
        in_specs=[
            pl.BlockSpec((1, 2, H // 2, W * C), lambda i: (i, 0, 0, 0)),
            pl.BlockSpec(params["w1b"].shape, lambda i: (0, 0, 0)),
            pl.BlockSpec(params["b1t"].shape, lambda i: (0, 0)),
            pl.BlockSpec(params["w2b"].shape, lambda i: (0, 0, 0)),
            pl.BlockSpec(params["b2t"].shape, lambda i: (0, 0)),
            pl.BlockSpec(params["w3p"].shape, lambda i: (0, 0)),
            pl.BlockSpec(params["b3"].shape, lambda i: (0, 0)),
            pl.BlockSpec(params["wl1"].shape, lambda i: (0, 0)),
            pl.BlockSpec(params["bl1"].shape, lambda i: (0, 0)),
            pl.BlockSpec(params["wl2"].shape, lambda i: (0, 0)),
            pl.BlockSpec(params["bl2"].shape, lambda i: (0, 0)),
        ],
        out_specs=(pl.BlockSpec((1, 1, 1), lambda i: (i, 0, 0)),
                   pl.BlockSpec((1, 1, OC3), lambda i: (i, 0, 0))),
        compiler_params=pltpu.CompilerParams(
            dimension_semantics=("parallel",),
            vmem_limit_bytes=32 * 1024 * 1024),
        cost_estimate=cost,
    )(xph, params["w1b"], params["b1t"], params["w2b"], params["b2t"],
      params["w3p"], params["b3"], params["wl1"], params["bl1"],
      params["wl2"], params["bl2"])

    out = out3.reshape(N, 1)
    feats = feat3.reshape(N, OC3)
    # torch returns _in.detach(); stop_gradient is the JAX analog.
    return out, jax.lax.stop_gradient(feats)


# ----------------------------------------------------------------------------
# Pure-JAX f32 reference (for correctness check)
# ----------------------------------------------------------------------------
def reference_forward(raw, x_nchw, cout_shape):
    x = jnp.transpose(x_nchw, (0, 2, 3, 1))

    def conv(h, w, b, stride):
        y = jax.lax.conv_general_dilated(
            h, w, window_strides=(stride, stride), padding="VALID",
            dimension_numbers=("NHWC", "OIHW", "NHWC"))
        return jax.nn.relu(y + b.reshape(1, 1, 1, -1))

    a1 = conv(x, raw["c1_w"], raw["c1_b"], 2)
    a2 = conv(a1, raw["c2_w"], raw["c2_b"], 1)
    a3 = conv(a2, raw["c3_w"], raw["c3_b"], 1)        # (N, 1, 1, 16)
    feats = a3.reshape(a3.shape[0], cout_shape)
    im = jax.nn.relu(feats @ raw["l1_w"].T + raw["l1_b"])
    out = jax.nn.sigmoid(im @ raw["l2_w"].T + raw["l2_b"])
    return out, feats


# ----------------------------------------------------------------------------
# main
# ----------------------------------------------------------------------------
if __name__ == "__main__":
    key = jax.random.PRNGKey(0)
    k_param, k_x = jax.random.split(key)

    batch = 2
    channels, H, W = 3, 16, 16        # x_dim = (3, 16, 16)
    h_dim = 32

    raw, params, cout_shape = init_discriminator_params(
        k_param, (channels, H, W), h_dim)
    x = jax.random.normal(k_x, (batch, channels, H, W), jnp.float32)

    fwd = jax.jit(discriminator_forward)
    out, feats = fwd(params, x)
    out = jax.block_until_ready(out)
    feats = jax.block_until_ready(feats)

    assert out.shape == (batch, 1), out.shape
    assert feats.shape == (batch, cout_shape), feats.shape
    assert bool(jnp.all((out >= 0.0) & (out <= 1.0)))
    assert bool(jnp.all(feats >= 0.0))                 # post-ReLU features

    out_ref, feats_ref = reference_forward(raw, x, cout_shape)
    assert bool(jnp.allclose(out, out_ref, atol=3e-2, rtol=5e-2))
    assert bool(jnp.allclose(feats, feats_ref, atol=3e-2, rtol=5e-2))

    print("KERNEL_OK")
</pallas_src>

<mosaic_0001>
module attributes {stable_mosaic.version = 11 : i64} {
  func.func @_disc_fused_kernel(%arg0: i32, %arg1: memref<1x2x8x48xf32, #tpu.memory_space<vmem>>, %arg2: memref<4x48x448xbf16, #tpu.memory_space<vmem>>, %arg3: memref<1x448xf32, #tpu.memory_space<vmem>>, %arg4: memref<4x448x128xbf16, #tpu.memory_space<vmem>>, %arg5: memref<1x128xf32, #tpu.memory_space<vmem>>, %arg6: memref<512x16xbf16, #tpu.memory_space<vmem>>, %arg7: memref<1x16xf32, #tpu.memory_space<vmem>>, %arg8: memref<16x32xbf16, #tpu.memory_space<vmem>>, %arg9: memref<1x32xf32, #tpu.memory_space<vmem>>, %arg10: memref<1x32xbf16, #tpu.memory_space<vmem>>, %arg11: memref<1x1xf32, #tpu.memory_space<vmem>>, %arg12: memref<1x1x1xf32, #tpu.memory_space<vmem>>, %arg13: memref<1x1x16xf32, #tpu.memory_space<vmem>>) attributes {dimension_semantics = [#tpu.dimension_semantics<parallel>], iteration_bounds = array<i64: 2>, scalar_prefetch = 0 : i64, scratch_operands = 0 : i64, tpu.core_type = #tpu.core_type<tc>, window_params = [{transform_indices = @transform_0, window_bounds = array<i64: 1, 2, 8, 48>}, {pipeline_mode = #tpu.pipeline_mode<synchronous>, transform_indices = @transform_1, window_bounds = array<i64: 4, 48, 448>}, {pipeline_mode = #tpu.pipeline_mode<synchronous>, transform_indices = @transform_2, window_bounds = array<i64: 1, 448>}, {pipeline_mode = #tpu.pipeline_mode<synchronous>, transform_indices = @transform_3, window_bounds = array<i64: 4, 448, 128>}, {pipeline_mode = #tpu.pipeline_mode<synchronous>, transform_indices = @transform_4, window_bounds = array<i64: 1, 128>}, {pipeline_mode = #tpu.pipeline_mode<synchronous>, transform_indices = @transform_5, window_bounds = array<i64: 512, 16>}, {pipeline_mode = #tpu.pipeline_mode<synchronous>, transform_indices = @transform_6, window_bounds = array<i64: 1, 16>}, {pipeline_mode = #tpu.pipeline_mode<synchronous>, transform_indices = @transform_7, window_bounds = array<i64: 16, 32>}, {pipeline_mode = #tpu.pipeline_mode<synchronous>, transform_indices = @transform_8, window_bounds = array<i64: 1, 32>}, {pipeline_mode = #tpu.pipeline_mode<synchronous>, transform_indices = @transform_9, window_bounds = array<i64: 1, 32>}, {pipeline_mode = #tpu.pipeline_mode<synchronous>, transform_indices = @transform_10, window_bounds = array<i64: 1, 1>}, {transform_indices = @transform_11, window_bounds = array<i64: 1, 1, 1>}, {transform_indices = @transform_12, window_bounds = array<i64: 1, 1, 16>}]} {
    %c0 = arith.constant 0 : index
    %c0_0 = arith.constant 0 : index
    %c0_1 = arith.constant 0 : index
    %c0_2 = arith.constant 0 : index
    %0 = vector.load %arg1[%c0, %c0_0, %c0_1, %c0_2] : memref<1x2x8x48xf32, #tpu.memory_space<vmem>>, vector<1x2x8x48xf32>
    %1 = vector.shape_cast %0 : vector<1x2x8x48xf32> to vector<2x8x48xf32>
    %2 = vector.extract_strided_slice %1 {offsets = [0, 0, 0], sizes = [1, 7, 48], strides = [1, 1, 1]} : vector<2x8x48xf32> to vector<1x7x48xf32>
    %3 = vector.shape_cast %2 : vector<1x7x48xf32> to vector<7x48xf32>
    %4 = arith.truncf %3 : vector<7x48xf32> to vector<7x48xbf16>
    %c0_3 = arith.constant 0 : index
    %c0_4 = arith.constant 0 : index
    %c0_5 = arith.constant 0 : index
    %5 = vector.load %arg2[%c0_3, %c0_4, %c0_5] : memref<4x48x448xbf16, #tpu.memory_space<vmem>>, vector<1x48x448xbf16>
    %6 = vector.shape_cast %5 : vector<1x48x448xbf16> to vector<48x448xbf16>
    %cst = arith.constant dense<0.000000e+00> : vector<7x448xf32>
    %7 = tpu.matmul %4, %6, %cst {dimension_numbers = #tpu.dot_dimension_numbers<[1], [0], [0], [1], [0, 0, 1, 1], [], []>} : vector<7x48xbf16>, vector<48x448xbf16>, vector<7x448xf32> -> vector<7x448xf32>
    %8 = vector.extract_strided_slice %1 {offsets = [1, 0, 0], sizes = [1, 7, 48], strides = [1, 1, 1]} : vector<2x8x48xf32> to vector<1x7x48xf32>
    %9 = vector.shape_cast %8 : vector<1x7x48xf32> to vector<7x48xf32>
    %10 = arith.truncf %9 : vector<7x48xf32> to vector<7x48xbf16>
    %c1 = arith.constant 1 : index
    %c0_6 = arith.constant 0 : index
    %c0_7 = arith.constant 0 : index
    %11 = vector.load %arg2[%c1, %c0_6, %c0_7] : memref<4x48x448xbf16, #tpu.memory_space<vmem>>, vector<1x48x448xbf16>
    %12 = vector.shape_cast %11 : vector<1x48x448xbf16> to vector<48x448xbf16>
    %cst_8 = arith.constant dense<0.000000e+00> : vector<7x448xf32>
    %13 = tpu.matmul %10, %12, %cst_8 {dimension_numbers = #tpu.dot_dimension_numbers<[1], [0], [0], [1], [0, 0, 1, 1], [], []>} : vector<7x48xbf16>, vector<48x448xbf16>, vector<7x448xf32> -> vector<7x448xf32>
    %14 = arith.addf %7, %13 : vector<7x448xf32>
    %15 = vector.extract_strided_slice %1 {offsets = [0, 1, 0], sizes = [1, 7, 48], strides = [1, 1, 1]} : vector<2x8x48xf32> to vector<1x7x48xf32>
    %16 = vector.shape_cast %15 : vector<1x7x48xf32> to vector<7x48xf32>
    %17 = arith.truncf %16 : vector<7x48xf32> to vector<7x48xbf16>
    %c2 = arith.constant 2 : index
    %c0_9 = arith.constant 0 : index
    %c0_10 = arith.constant 0 : index
    %18 = vector.load %arg2[%c2, %c0_9, %c0_10] : memref<4x48x448xbf16, #tpu.memory_space<vmem>>, vector<1x48x448xbf16>
    %19 = vector.shape_cast %18 : vector<1x48x448xbf16> to vector<48x448xbf16>
    %cst_11 = arith.constant dense<0.000000e+00> : vector<7x448xf32>
    %20 = tpu.matmul %17, %19, %cst_11 {dimension_numbers = #tpu.dot_dimension_numbers<[1], [0], [0], [1], [0, 0, 1, 1], [], []>} : vector<7x48xbf16>, vector<48x448xbf16>, vector<7x448xf32> -> vector<7x448xf32>
    %21 = arith.addf %14, %20 : vector<7x448xf32>
    %22 = vector.extract_strided_slice %1 {offsets = [1, 1, 0], sizes = [1, 7, 48], strides = [1, 1, 1]} : vector<2x8x48xf32> to vector<1x7x48xf32>
    %23 = vector.shape_cast %22 : vector<1x7x48xf32> to vector<7x48xf32>
    %24 = arith.truncf %23 : vector<7x48xf32> to vector<7x48xbf16>
    %c3 = arith.constant 3 : index
    %c0_12 = arith.constant 0 : index
    %c0_13 = arith.constant 0 : index
    %25 = vector.load %arg2[%c3, %c0_12, %c0_13] : memref<4x48x448xbf16, #tpu.memory_space<vmem>>, vector<1x48x448xbf16>
    %26 = vector.shape_cast %25 : vector<1x48x448xbf16> to vector<48x448xbf16>
    %cst_14 = arith.constant dense<0.000000e+00> : vector<7x448xf32>
    %27 = tpu.matmul %24, %26, %cst_14 {dimension_numbers = #tpu.dot_dimension_numbers<[1], [0], [0], [1], [0, 0, 1, 1], [], []>} : vector<7x48xbf16>, vector<48x448xbf16>, vector<7x448xf32> -> vector<7x448xf32>
    %28 = arith.addf %21, %27 : vector<7x448xf32>
    %c0_15 = arith.constant 0 : index
    %c0_16 = arith.constant 0 : index
    %29 = vector.load %arg3[%c0_15, %c0_16] : memref<1x448xf32, #tpu.memory_space<vmem>>, vector<1x448xf32>
    %30 = vector.broadcast %29 : vector<1x448xf32> to vector<7x448xf32>
    %31 = arith.addf %28, %30 : vector<7x448xf32>
    %cst_17 = arith.constant 0.000000e+00 : f32
    %32 = vector.broadcast %cst_17 : f32 to vector<7x448xf32>
    %33 = arith.maximumf %31, %32 : vector<7x448xf32>
    %34 = vector.extract_strided_slice %33 {offsets = [0, 0], sizes = [4, 448], strides = [1, 1]} : vector<7x448xf32> to vector<4x448xf32>
    %35 = arith.truncf %34 : vector<4x448xf32> to vector<4x448xbf16>
    %c0_18 = arith.constant 0 : index
    %c0_19 = arith.constant 0 : index
    %c0_20 = arith.constant 0 : index
    %36 = vector.load %arg4[%c0_18, %c0_19, %c0_20] : memref<4x448x128xbf16, #tpu.memory_space<vmem>>, vector<1x448x128xbf16>
    %37 = vector.shape_cast %36 : vector<1x448x128xbf16> to vector<448x128xbf16>
    %cst_21 = arith.constant dense<0.000000e+00> : vector<4x128xf32>
    %38 = tpu.matmul %35, %37, %cst_21 {dimension_numbers = #tpu.dot_dimension_numbers<[1], [0], [0], [1], [0, 0, 1, 1], [], []>} : vector<4x448xbf16>, vector<448x128xbf16>, vector<4x128xf32> -> vector<4x128xf32>
    %39 = vector.extract_strided_slice %33 {offsets = [1, 0], sizes = [4, 448], strides = [1, 1]} : vector<7x448xf32> to vector<4x448xf32>
    %40 = arith.truncf %39 : vector<4x448xf32> to vector<4x448xbf16>
    %c1_22 = arith.constant 1 : index
    %c0_23 = arith.constant 0 : index
    %c0_24 = arith.constant 0 : index
    %41 = vector.load %arg4[%c1_22, %c0_23, %c0_24] : memref<4x448x128xbf16, #tpu.memory_space<vmem>>, vector<1x448x128xbf16>
    %42 = vector.shape_cast %41 : vector<1x448x128xbf16> to vector<448x128xbf16>
    %cst_25 = arith.constant dense<0.000000e+00> : vector<4x128xf32>
    %43 = tpu.matmul %40, %42, %cst_25 {dimension_numbers = #tpu.dot_dimension_numbers<[1], [0], [0], [1], [0, 0, 1, 1], [], []>} : vector<4x448xbf16>, vector<448x128xbf16>, vector<4x128xf32> -> vector<4x128xf32>
    %44 = arith.addf %38, %43 : vector<4x128xf32>
    %45 = vector.extract_strided_slice %33 {offsets = [2, 0], sizes = [4, 448], strides = [1, 1]} : vector<7x448xf32> to vector<4x448xf32>
    %46 = arith.truncf %45 : vector<4x448xf32> to vector<4x448xbf16>
    %c2_26 = arith.constant 2 : index
    %c0_27 = arith.constant 0 : index
    %c0_28 = arith.constant 0 : index
    %47 = vector.load %arg4[%c2_26, %c0_27, %c0_28] : memref<4x448x128xbf16, #tpu.memory_space<vmem>>, vector<1x448x128xbf16>
    %48 = vector.shape_cast %47 : vector<1x448x128xbf16> to vector<448x128xbf16>
    %cst_29 = arith.constant dense<0.000000e+00> : vector<4x128xf32>
    %49 = tpu.matmul %46, %48, %cst_29 {dimension_numbers = #tpu.dot_dimension_numbers<[1], [0], [0], [1], [0, 0, 1, 1], [], []>} : vector<4x448xbf16>, vector<448x128xbf16>, vector<4x128xf32> -> vector<4x128xf32>
    %50 = arith.addf %44, %49 : vector<4x128xf32>
    %51 = vector.extract_strided_slice %33 {offsets = [3, 0], sizes = [4, 448], strides = [1, 1]} : vector<7x448xf32> to vector<4x448xf32>
    %52 = arith.truncf %51 : vector<4x448xf32> to vector<4x448xbf16>
    %c3_30 = arith.constant 3 : index
    %c0_31 = arith.constant 0 : index
    %c0_32 = arith.constant 0 : index
    %53 = vector.load %arg4[%c3_30, %c0_31, %c0_32] : memref<4x448x128xbf16, #tpu.memory_space<vmem>>, vector<1x448x128xbf16>
    %54 = vector.shape_cast %53 : vector<1x448x128xbf16> to vector<448x128xbf16>
    %cst_33 = arith.constant dense<0.000000e+00> : vector<4x128xf32>
    %55 = tpu.matmul %52, %54, %cst_33 {dimension_numbers = #tpu.dot_dimension_numbers<[1], [0], [0], [1], [0, 0, 1, 1], [], []>} : vector<4x448xbf16>, vector<448x128xbf16>, vector<4x128xf32> -> vector<4x128xf32>
    %56 = arith.addf %50, %55 : vector<4x128xf32>
    %c0_34 = arith.constant 0 : index
    %c0_35 = arith.constant 0 : index
    %57 = vector.load %arg5[%c0_34, %c0_35] : memref<1x128xf32, #tpu.memory_space<vmem>>, vector<1x128xf32>
    %58 = vector.broadcast %57 : vector<1x128xf32> to vector<4x128xf32>
    %59 = arith.addf %56, %58 : vector<4x128xf32>
    %cst_36 = arith.constant 0.000000e+00 : f32
    %60 = vector.broadcast %cst_36 : f32 to vector<4x128xf32>
    %61 = arith.maximumf %59, %60 : vector<4x128xf32>
    %c0_37 = arith.constant 0 : index
    %c0_38 = arith.constant 0 : index
    %62 = vector.load %arg6[%c0_37, %c0_38] : memref<512x16xbf16, #tpu.memory_space<vmem>>, vector<512x16xbf16>
    %63 = vector.extract_strided_slice %61 {offsets = [0, 0], sizes = [1, 128], strides = [1, 1]} : vector<4x128xf32> to vector<1x128xf32>
    %64 = arith.truncf %63 : vector<1x128xf32> to vector<1x128xbf16>
    %65 = vector.extract_strided_slice %62 {offsets = [0, 0], sizes = [128, 16], strides = [1, 1]} : vector<512x16xbf16> to vector<128x16xbf16>
    %cst_39 = arith.constant dense<0.000000e+00> : vector<1x16xf32>
    %66 = tpu.matmul %64, %65, %cst_39 {dimension_numbers = #tpu.dot_dimension_numbers<[1], [0], [0], [1], [0, 0, 1, 1], [], []>} : vector<1x128xbf16>, vector<128x16xbf16>, vector<1x16xf32> -> vector<1x16xf32>
    %67 = vector.extract_strided_slice %61 {offsets = [1, 0], sizes = [1, 128], strides = [1, 1]} : vector<4x128xf32> to vector<1x128xf32>
    %68 = arith.truncf %67 : vector<1x128xf32> to vector<1x128xbf16>
    %69 = vector.extract_strided_slice %62 {offsets = [128, 0], sizes = [128, 16], strides = [1, 1]} : vector<512x16xbf16> to vector<128x16xbf16>
    %cst_40 = arith.constant dense<0.000000e+00> : vector<1x16xf32>
    %70 = tpu.matmul %68, %69, %cst_40 {dimension_numbers = #tpu.dot_dimension_numbers<[1], [0], [0], [1], [0, 0, 1, 1], [], []>} : vector<1x128xbf16>, vector<128x16xbf16>, vector<1x16xf32> -> vector<1x16xf32>
    %71 = arith.addf %66, %70 : vector<1x16xf32>
    %72 = vector.extract_strided_slice %61 {offsets = [2, 0], sizes = [1, 128], strides = [1, 1]} : vector<4x128xf32> to vector<1x128xf32>
    %73 = arith.truncf %72 : vector<1x128xf32> to vector<1x128xbf16>
    %74 = vector.extract_strided_slice %62 {offsets = [256, 0], sizes = [128, 16], strides = [1, 1]} : vector<512x16xbf16> to vector<128x16xbf16>
    %cst_41 = arith.constant dense<0.000000e+00> : vector<1x16xf32>
    %75 = tpu.matmul %73, %74, %cst_41 {dimension_numbers = #tpu.dot_dimension_numbers<[1], [0], [0], [1], [0, 0, 1, 1], [], []>} : vector<1x128xbf16>, vector<128x16xbf16>, vector<1x16xf32> -> vector<1x16xf32>
    %76 = arith.addf %71, %75 : vector<1x16xf32>
    %77 = vector.extract_strided_slice %61 {offsets = [3, 0], sizes = [1, 128], strides = [1, 1]} : vector<4x128xf32> to vector<1x128xf32>
    %78 = arith.truncf %77 : vector<1x128xf32> to vector<1x128xbf16>
    %79 = vector.extract_strided_slice %62 {offsets = [384, 0], sizes = [128, 16], strides = [1, 1]} : vector<512x16xbf16> to vector<128x16xbf16>
    %cst_42 = arith.constant dense<0.000000e+00> : vector<1x16xf32>
    %80 = tpu.matmul %78, %79, %cst_42 {dimension_numbers = #tpu.dot_dimension_numbers<[1], [0], [0], [1], [0, 0, 1, 1], [], []>} : vector<1x128xbf16>, vector<128x16xbf16>, vector<1x16xf32> -> vector<1x16xf32>
    %81 = arith.addf %76, %80 : vector<1x16xf32>
    %c0_43 = arith.constant 0 : index
    %c0_44 = arith.constant 0 : index
    %82 = vector.load %arg7[%c0_43, %c0_44] : memref<1x16xf32, #tpu.memory_space<vmem>>, vector<1x16xf32>
    %83 = arith.addf %81, %82 : vector<1x16xf32>
    %cst_45 = arith.constant 0.000000e+00 : f32
    %84 = vector.broadcast %cst_45 : f32 to vector<1x16xf32>
    %85 = arith.maximumf %83, %84 : vector<1x16xf32>
    %c0_46 = arith.constant 0 : index
    %c0_47 = arith.constant 0 : index
    %c0_48 = arith.constant 0 : index
    %86 = vector.load %arg13[%c0_46, %c0_47, %c0_48] : memref<1x1x16xf32, #tpu.memory_space<vmem>>, vector<1x1x16xf32>
    %87 = vector.shape_cast %86 : vector<1x1x16xf32> to vector<1x16xf32>
    %88 = vector.shape_cast %85 : vector<1x16xf32> to vector<1x1x16xf32>
    tpu.vector_store %arg13[%c0_46, %c0_47, %c0_48], %88 {strides = array<i32>} : memref<1x1x16xf32, #tpu.memory_space<vmem>>, vector<1x1x16xf32>,
    %89 = arith.truncf %85 : vector<1x16xf32> to vector<1x16xbf16>
    %c0_49 = arith.constant 0 : index
    %c0_50 = arith.constant 0 : index
    %90 = vector.load %arg8[%c0_49, %c0_50] : memref<16x32xbf16, #tpu.memory_space<vmem>>, vector<16x32xbf16>
    %cst_51 = arith.constant dense<0.000000e+00> : vector<1x32xf32>
    %91 = tpu.matmul %89, %90, %cst_51 {dimension_numbers = #tpu.dot_dimension_numbers<[1], [0], [0], [1], [0, 0, 1, 1], [], []>} : vector<1x16xbf16>, vector<16x32xbf16>, vector<1x32xf32> -> vector<1x32xf32>
    %c0_52 = arith.constant 0 : index
    %c0_53 = arith.constant 0 : index
    %92 = vector.load %arg9[%c0_52, %c0_53] : memref<1x32xf32, #tpu.memory_space<vmem>>, vector<1x32xf32>
    %93 = arith.addf %91, %92 : vector<1x32xf32>
    %cst_54 = arith.constant 0.000000e+00 : f32
    %94 = vector.broadcast %cst_54 : f32 to vector<1x32xf32>
    %95 = arith.maximumf %93, %94 : vector<1x32xf32>
    %c0_55 = arith.constant 0 : index
    %c0_56 = arith.constant 0 : index
    %96 = vector.load %arg10[%c0_55, %c0_56] : memref<1x32xbf16, #tpu.memory_space<vmem>>, vector<1x32xbf16>
    %97 = arith.extf %96 : vector<1x32xbf16> to vector<1x32xf32>
    %98 = arith.mulf %95, %97 : vector<1x32xf32>
    %cst_57 = arith.constant dense<0.000000e+00> : vector<1xf32>
    %99 = vector.multi_reduction <add>, %98, %cst_57 [1] : vector<1x32xf32> to vector<1xf32>
    %100 = vector.shape_cast %99 : vector<1xf32> to vector<1x1xf32>
    %c0_58 = arith.constant 0 : index
    %c0_59 = arith.constant 0 : index
    %101 = vector.load %arg11[%c0_58, %c0_59] : memref<1x1xf32, #tpu.memory_space<vmem>>, vector<1x1xf32>
    %102 = arith.addf %100, %101 : vector<1x1xf32>
    %103 = arith.negf %102 : vector<1x1xf32>
    %104 = math.exp %103 : vector<1x1xf32>
    %cst_60 = arith.constant 1.000000e+00 : f32
    %105 = vector.broadcast %cst_60 : f32 to vector<1x1xf32>
    %106 = arith.addf %105, %104 : vector<1x1xf32>
    %107 = arith.divf %105, %106 : vector<1x1xf32>
    %c0_61 = arith.constant 0 : index
    %c0_62 = arith.constant 0 : index
    %c0_63 = arith.constant 0 : index
    %108 = vector.load %arg12[%c0_61, %c0_62, %c0_63] : memref<1x1x1xf32, #tpu.memory_space<vmem>>, vector<1x1x1xf32>
    %109 = vector.shape_cast %108 : vector<1x1x1xf32> to vector<1x1xf32>
    %110 = vector.shape_cast %107 : vector<1x1xf32> to vector<1x1x1xf32>
    tpu.vector_store %arg12[%c0_61, %c0_62, %c0_63], %110 {strides = array<i32>} : memref<1x1x1xf32, #tpu.memory_space<vmem>>, vector<1x1x1xf32>,
    return
  }
  func.func @transform_0(%arg0: i32) -> (i32, i32, i32, i32) {
    %c0_i32 = arith.constant 0 : i32
    %c0_i32_0 = arith.constant 0 : i32
    %c0_i32_1 = arith.constant 0 : i32
    %c0_i32_2 = arith.constant 0 : i32
    return %arg0, %c0_i32, %c0_i32_0, %c0_i32_1 : i32, i32, i32, i32
  }
  func.func @transform_1(%arg0: i32) -> (i32, i32, i32) {
    %c0_i32 = arith.constant 0 : i32
    %c0_i32_0 = arith.constant 0 : i32
    %c0_i32_1 = arith.constant 0 : i32
    %c0_i32_2 = arith.constant 0 : i32
    return %c0_i32, %c0_i32_0, %c0_i32_1 : i32, i32, i32
  }
  func.func @transform_2(%arg0: i32) -> (i32, i32) {
    %c0_i32 = arith.constant 0 : i32
    %c0_i32_0 = arith.constant 0 : i32
    %c0_i32_1 = arith.constant 0 : i32
    return %c0_i32, %c0_i32_0 : i32, i32
  }
  func.func @transform_3(%arg0: i32) -> (i32, i32, i32) {
    %c0_i32 = arith.constant 0 : i32
    %c0_i32_0 = arith.constant 0 : i32
    %c0_i32_1 = arith.constant 0 : i32
    %c0_i32_2 = arith.constant 0 : i32
    return %c0_i32, %c0_i32_0, %c0_i32_1 : i32, i32, i32
  }
  func.func @transform_4(%arg0: i32) -> (i32, i32) {
    %c0_i32 = arith.constant 0 : i32
    %c0_i32_0 = arith.constant 0 : i32
    %c0_i32_1 = arith.constant 0 : i32
    return %c0_i32, %c0_i32_0 : i32, i32
  }
  func.func @transform_5(%arg0: i32) -> (i32, i32) {
    %c0_i32 = arith.constant 0 : i32
    %c0_i32_0 = arith.constant 0 : i32
    %c0_i32_1 = arith.constant 0 : i32
    return %c0_i32, %c0_i32_0 : i32, i32
  }
  func.func @transform_6(%arg0: i32) -> (i32, i32) {
    %c0_i32 = arith.constant 0 : i32
    %c0_i32_0 = arith.constant 0 : i32
    %c0_i32_1 = arith.constant 0 : i32
    return %c0_i32, %c0_i32_0 : i32, i32
  }
  func.func @transform_7(%arg0: i32) -> (i32, i32) {
    %c0_i32 = arith.constant 0 : i32
    %c0_i32_0 = arith.constant 0 : i32
    %c0_i32_1 = arith.constant 0 : i32
    return %c0_i32, %c0_i32_0 : i32, i32
  }
  func.func @transform_8(%arg0: i32) -> (i32, i32) {
    %c0_i32 = arith.constant 0 : i32
    %c0_i32_0 = arith.constant 0 : i32
    %c0_i32_1 = arith.constant 0 : i32
    return %c0_i32, %c0_i32_0 : i32, i32
  }
  func.func @transform_9(%arg0: i32) -> (i32, i32) {
    %c0_i32 = arith.constant 0 : i32
    %c0_i32_0 = arith.constant 0 : i32
    %c0_i32_1 = arith.constant 0 : i32
    return %c0_i32, %c0_i32_0 : i32, i32
  }
  func.func @transform_10(%arg0: i32) -> (i32, i32) {
    %c0_i32 = arith.constant 0 : i32
    %c0_i32_0 = arith.constant 0 : i32
    %c0_i32_1 = arith.constant 0 : i32
    return %c0_i32, %c0_i32_0 : i32, i32
  }
  func.func @transform_11(%arg0: i32) -> (i32, i32, i32) {
    %c0_i32 = arith.constant 0 : i32
    %c0_i32_0 = arith.constant 0 : i32
    %c0_i32_1 = arith.constant 0 : i32
    return %arg0, %c0_i32, %c0_i32_0 : i32, i32, i32
  }
  func.func @transform_12(%arg0: i32) -> (i32, i32, i32) {
    %c0_i32 = arith.constant 0 : i32
    %c0_i32_0 = arith.constant 0 : i32
    %c0_i32_1 = arith.constant 0 : i32
    return %arg0, %c0_i32, %c0_i32_0 : i32, i32, i32
  }
}

</mosaic_0001>

<llo_original>
// kernel: discriminator_forward.1
$region0: #{discriminator_forward.1}
  #allocation0 [shape = 'u32[]', space=smem, size = 0x4, offset = 0x4, fixed_abs, tag = 'smem constant byte address 0x4 - core index']
  #allocation1 [shape = 'u32[144,128]{1,0:T(1,128)}', space=vmem, size = 0x12000, scoped, tag = 'internal scratch']
  #allocation2 [shape = 'f32[1,1]{1,0:T(1,128)S(1)}', space=vmem, size = 0x200, scoped, tag = 'scoped memory for discriminator_forward.1']
  %s0 = inlined_call_operand.vmem [shape: f32[2,2,8,48], index: 0, kind: input, shape index: {}]
  %s1 = inlined_call_operand.vmem [shape: bf16[4,48,448], index: 1, kind: input, shape index: {}]
  %s2 = inlined_call_operand.vmem [shape: f32[1,448], index: 2, kind: input, shape index: {}]
  %s3 = inlined_call_operand.vmem [shape: bf16[4,448,128], index: 3, kind: input, shape index: {}]
  %s4 = inlined_call_operand.vmem [shape: f32[1,128], index: 4, kind: input, shape index: {}]
  %s5 = inlined_call_operand.vmem [shape: bf16[512,16], index: 5, kind: input, shape index: {}]
  %s6 = inlined_call_operand.vmem [shape: f32[1,16], index: 6, kind: input, shape index: {}]
  %s7 = inlined_call_operand.vmem [shape: bf16[16,32], index: 7, kind: input, shape index: {}]
  %s8 = inlined_call_operand.vmem [shape: f32[1,32], index: 8, kind: input, shape index: {}]
  %s9 = inlined_call_operand.vmem [shape: bf16[1,32], index: 9, kind: input, shape index: {}]
  %s10 = inlined_call_operand.<no memory space> [shape: f32[1,1], index: 10, kind: input, shape index: {}]
  %s11 = inlined_call_operand.vmem [shape: f32[2,1,1], index: 11, kind: output, shape index: {0}]
  %s12 = inlined_call_operand.hbm [shape: f32[2,1,16], index: 12, kind: output, shape index: {1}]
  %13 = xla_tuple %s11, %s12
  %s14 = sld [smem:[#allocation0]]
  $region85: #{discriminator_forward.1} parent=0
    _
  %s16 = ssub.s32 1, %s14
  %s17 = scalar_select 0, %s16, %s14
  %v18 = vstv %s10
  %19 = vst [vmem:[#allocation2] sm:$0x1] %v18
  $region1: #{discriminator_forward.1} parent=0
    #allocation3 [shape = 'u8[1024]{0}', space=vmem, size = 0x400, scoped, tag = 'output window, operand 1']
    #allocation4 [shape = 's32[2]{0}', space=sflag, size = 0x8, scoped, tag = 'scoped memory for discriminator_forward.1']
    %20 = vsyncpa [#allocation4], 0
    %s21 = scalar_lea.sflag [#allocation4], 1
    %22 = vsyncpa %s21, 0
    loop: start=0, step=1, limit=4
    $region2: #{discriminator_forward.1} parent=1 // loop_pre_header
      _
    $region3: #{discriminator_forward.1} parent=1 // loop_header
      %s24 = sphi 0, %s28
      %p25 = scmp.ge.s32.totalorder %s24, 4
      %s34 = sphi 0, %s36
      %s37 = sphi 0, %s34
      %s38 = sphi 0, %s37
      %s54 = sphi 0, %s38
      %s58 = sphi 0, %s58
      %s60 = sphi 0, %s58
      %s61 = sphi 0, %s60
      %s75 = sphi 0, %s61
      %s79 = sphi 0, %s79
      %s81 = sphi 0, %s79
      %s82 = sphi 0, %s81
      %s96 = sphi 0, %s82
      %s100 = sphi 0, %s100
      %s102 = sphi 0, %s100
      %s103 = sphi 0, %s102
      %s117 = sphi 0, %s103
      %s121 = sphi 0, %s121
      %s123 = sphi 0, %s121
      %s124 = sphi 0, %s123
      %s138 = sphi 0, %s124
      %s142 = sphi 0, %s142
      %s144 = sphi 0, %s142
      %s145 = sphi 0, %s144
      %s159 = sphi 0, %s145
      %s163 = sphi 0, %s163
      %s165 = sphi 0, %s163
      %s166 = sphi 0, %s165
      %s180 = sphi 0, %s166
      %s184 = sphi 0, %s184
      %s186 = sphi 0, %s184
      %s187 = sphi 0, %s186
      %s201 = sphi 0, %s187
      %s205 = sphi 0, %s205
      %s207 = sphi 0, %s205
      %s208 = sphi 0, %s207
      %s222 = sphi 0, %s208
      %s226 = sphi 0, %s226
      %s228 = sphi 0, %s226
      %s229 = sphi 0, %s228
      %s243 = sphi 0, %s229
      %s247 = sphi 0, %s247
      %s249 = sphi 0, %s247
      %s250 = sphi 0, %s249
      %s264 = sphi 0, %s250
      %s270 = sphi 0, %s272
      %s273 = sphi 0, %s270
      %s274 = sphi 0, %s273
      %s290 = sphi 0, %s274
      %s296 = sphi 0, %s298
      %s299 = sphi 0, %s296
      %s300 = sphi 0, %s299
      %s316 = sphi 0, %s300
    $region4: #{discriminator_forward.1} parent=1 // loop_header_branch
      %27 = sbr.rel (%p25) target = $region8
    $region5: #{discriminator_forward.1} parent=1 // loop_body
      %s29 = ssub.s32 %s24, 1
      %s30 = ssub.s32 %s24, 2
      %s31 = sadd.s32 %s24, 1
      %s32 = ssub.s32 %s24, %s31
      %p33 = scmp.eq.s32.totalorder %s32, 0
      %s35 = sadd.s32 %s34, 1
      %s36 = scalar_select %p33, %s34, %s35
      %p39 = pneg %p33
      %p40 = scmp.eq.s32.totalorder %s24, 1
      %p41 = por %p39, %p40
      %p42 = scmp.ne.s32.totalorder %s34, %s37
      %p43 = scmp.eq.s32.totalorder %s24, 0
      %p44 = por %p42, %p43
      %p45 = scmp.ne.s32.totalorder %s34, %s37
      %p46 = scmp.eq.s32.totalorder %s29, 1
      %p47 = por %p45, %p46
      %p48 = scmp.ne.s32.totalorder %s37, %s38
      %p49 = scmp.eq.s32.totalorder %s29, 0
      %p50 = por %p48, %p49
      %p51 = scmp.ne.s32.totalorder %s37, %s38
      %p52 = scmp.eq.s32.totalorder %s30, 1
      %p53 = por %p51, %p52
      %p55 = scmp.ne.s32.totalorder %s38, %s54
      %p56 = scmp.eq.s32.totalorder %s30, 0
      %p57 = por %p55, %p56
      %s59 = sadd.s32 %s58, 1
      %p62 = scmp.eq.s32.totalorder %s24, 1
      %p63 = scmp.ne.s32.totalorder %s58, %s60
      %p64 = scmp.eq.s32.totalorder %s24, 0
      %p65 = por %p63, %p64
      %p66 = scmp.ne.s32.totalorder %s58, %s60
      %p67 = scmp.eq.s32.totalorder %s29, 1
      %p68 = por %p66, %p67
      %p69 = scmp.ne.s32.totalorder %s60, %s61
      %p70 = scmp.eq.s32.totalorder %s29, 0
      %p71 = por %p69, %p70
      %p72 = scmp.ne.s32.totalorder %s60, %s61
      %p73 = scmp.eq.s32.totalorder %s30, 1
      %p74 = por %p72, %p73
      %p76 = scmp.ne.s32.totalorder %s61, %s75
      %p77 = scmp.eq.s32.totalorder %s30, 0
      %p78 = por %p76, %p77
      %s80 = sadd.s32 %s79, 1
      %p83 = scmp.eq.s32.totalorder %s24, 1
      %p84 = scmp.ne.s32.totalorder %s79, %s81
      %p85 = scmp.eq.s32.totalorder %s24, 0
      %p86 = por %p84, %p85
      %p87 = scmp.ne.s32.totalorder %s79, %s81
      %p88 = scmp.eq.s32.totalorder %s29, 1
      %p89 = por %p87, %p88
      %p90 = scmp.ne.s32.totalorder %s81, %s82
      %p91 = scmp.eq.s32.totalorder %s29, 0
      %p92 = por %p90, %p91
      %p93 = scmp.ne.s32.totalorder %s81, %s82
      %p94 = scmp.eq.s32.totalorder %s30, 1
      %p95 = por %p93, %p94
      %p97 = scmp.ne.s32.totalorder %s82, %s96
      %p98 = scmp.eq.s32.totalorder %s30, 0
      %p99 = por %p97, %p98
      %s101 = sadd.s32 %s100, 1
      %p104 = scmp.eq.s32.totalorder %s24, 1
      %p105 = scmp.ne.s32.totalorder %s100, %s102
      %p106 = scmp.eq.s32.totalorder %s24, 0
      %p107 = por %p105, %p106
      %p108 = scmp.ne.s32.totalorder %s100, %s102
      %p109 = scmp.eq.s32.totalorder %s29, 1
      %p110 = por %p108, %p109
      %p111 = scmp.ne.s32.totalorder %s102, %s103
      %p112 = scmp.eq.s32.totalorder %s29, 0
      %p113 = por %p111, %p112
      %p114 = scmp.ne.s32.totalorder %s102, %s103
      %p115 = scmp.eq.s32.totalorder %s30, 1
      %p116 = por %p114, %p115
      %p118 = scmp.ne.s32.totalorder %s103, %s117
      %p119 = scmp.eq.s32.totalorder %s30, 0
      %p120 = por %p118, %p119
      %s122 = sadd.s32 %s121, 1
      %p125 = scmp.eq.s32.totalorder %s24, 1
      %p126 = scmp.ne.s32.totalorder %s121, %s123
      %p127 = scmp.eq.s32.totalorder %s24, 0
      %p128 = por %p126, %p127
      %p129 = scmp.ne.s32.totalorder %s121, %s123
      %p130 = scmp.eq.s32.totalorder %s29, 1
      %p131 = por %p129, %p130
      %p132 = scmp.ne.s32.totalorder %s123, %s124
      %p133 = scmp.eq.s32.totalorder %s29, 0
      %p134 = por %p132, %p133
      %p135 = scmp.ne.s32.totalorder %s123, %s124
      %p136 = scmp.eq.s32.totalorder %s30, 1
      %p137 = por %p135, %p136
      %p139 = scmp.ne.s32.totalorder %s124, %s138
      %p140 = scmp.eq.s32.totalorder %s30, 0
      %p141 = por %p139, %p140
      %s143 = sadd.s32 %s142, 1
      %p146 = scmp.eq.s32.totalorder %s24, 1
      %p147 = scmp.ne.s32.totalorder %s142, %s144
      %p148 = scmp.eq.s32.totalorder %s24, 0
      %p149 = por %p147, %p148
      %p150 = scmp.ne.s32.totalorder %s142, %s144
      %p151 = scmp.eq.s32.totalorder %s29, 1
      %p152 = por %p150, %p151
      %p153 = scmp.ne.s32.totalorder %s144, %s145
      %p154 = scmp.eq.s32.totalorder %s29, 0
      %p155 = por %p153, %p154
      %p156 = scmp.ne.s32.totalorder %s144, %s145
      %p157 = scmp.eq.s32.totalorder %s30, 1
      %p158 = por %p156, %p157
      %p160 = scmp.ne.s32.totalorder %s145, %s159
      %p161 = scmp.eq.s32.totalorder %s30, 0
      %p162 = por %p160, %p161
      %s164 = sadd.s32 %s163, 1
      %p167 = scmp.eq.s32.totalorder %s24, 1
      %p168 = scmp.ne.s32.totalorder %s163, %s165
      %p169 = scmp.eq.s32.totalorder %s24, 0
      %p170 = por %p168, %p169
      %p171 = scmp.ne.s32.totalorder %s163, %s165
      %p172 = scmp.eq.s32.totalorder %s29, 1
      %p173 = por %p171, %p172
      %p174 = scmp.ne.s32.totalorder %s165, %s166
      %p175 = scmp.eq.s32.totalorder %s29, 0
      %p176 = por %p174, %p175
      %p177 = scmp.ne.s32.totalorder %s165, %s166
      %p178 = scmp.eq.s32.totalorder %s30, 1
      %p179 = por %p177, %p178
      %p181 = scmp.ne.s32.totalorder %s166, %s180
      %p182 = scmp.eq.s32.totalorder %s30, 0
      %p183 = por %p181, %p182
      %s185 = sadd.s32 %s184, 1
      %p188 = scmp.eq.s32.totalorder %s24, 1
      %p189 = scmp.ne.s32.totalorder %s184, %s186
      %p190 = scmp.eq.s32.totalorder %s24, 0
      %p191 = por %p189, %p190
      %p192 = scmp.ne.s32.totalorder %s184, %s186
      %p193 = scmp.eq.s32.totalorder %s29, 1
      %p194 = por %p192, %p193
      %p195 = scmp.ne.s32.totalorder %s186, %s187
      %p196 = scmp.eq.s32.totalorder %s29, 0
      %p197 = por %p195, %p196
      %p198 = scmp.ne.s32.totalorder %s186, %s187
      %p199 = scmp.eq.s32.totalorder %s30, 1
      %p200 = por %p198, %p199
      %p202 = scmp.ne.s32.totalorder %s187, %s201
      %p203 = scmp.eq.s32.totalorder %s30, 0
      %p204 = por %p202, %p203
      %s206 = sadd.s32 %s205, 1
      %p209 = scmp.eq.s32.totalorder %s24, 1
      %p210 = scmp.ne.s32.totalorder %s205, %s207
      %p211 = scmp.eq.s32.totalorder %s24, 0
      %p212 = por %p210, %p211
      %p213 = scmp.ne.s32.totalorder %s205, %s207
      %p214 = scmp.eq.s32.totalorder %s29, 1
      %p215 = por %p213, %p214
      %p216 = scmp.ne.s32.totalorder %s207, %s208
      %p217 = scmp.eq.s32.totalorder %s29, 0
      %p218 = por %p216, %p217
      %p219 = scmp.ne.s32.totalorder %s207, %s208
      %p220 = scmp.eq.s32.totalorder %s30, 1
      %p221 = por %p219, %p220
      %p223 = scmp.ne.s32.totalorder %s208, %s222
      %p224 = scmp.eq.s32.totalorder %s30, 0
      %p225 = por %p223, %p224
      %s227 = sadd.s32 %s226, 1
      %p230 = scmp.eq.s32.totalorder %s24, 1
      %p231 = scmp.ne.s32.totalorder %s226, %s228
      %p232 = scmp.eq.s32.totalorder %s24, 0
      %p233 = por %p231, %p232
      %p234 = scmp.ne.s32.totalorder %s226, %s228
      %p235 = scmp.eq.s32.totalorder %s29, 1
      %p236 = por %p234, %p235
      %p237 = scmp.ne.s32.totalorder %s228, %s229
      %p238 = scmp.eq.s32.totalorder %s29, 0
      %p239 = por %p237, %p238
      %p240 = scmp.ne.s32.totalorder %s228, %s229
      %p241 = scmp.eq.s32.totalorder %s30, 1
      %p242 = por %p240, %p241
      %p244 = scmp.ne.s32.totalorder %s229, %s243
      %p245 = scmp.eq.s32.totalorder %s30, 0
      %p246 = por %p244, %p245
      %s248 = sadd.s32 %s247, 1
      %p251 = scmp.eq.s32.totalorder %s24, 1
      %p252 = scmp.ne.s32.totalorder %s247, %s249
      %p253 = scmp.eq.s32.totalorder %s24, 0
      %p254 = por %p252, %p253
      %p255 = scmp.ne.s32.totalorder %s247, %s249
      %p256 = scmp.eq.s32.totalorder %s29, 1
      %p257 = por %p255, %p256
      %p258 = scmp.ne.s32.totalorder %s249, %s250
      %p259 = scmp.eq.s32.totalorder %s29, 0
      %p260 = por %p258, %p259
      %p261 = scmp.ne.s32.totalorder %s249, %s250
      %p262 = scmp.eq.s32.totalorder %s30, 1
      %p263 = por %p261, %p262
      %p265 = scmp.ne.s32.totalorder %s250, %s264
      %p266 = scmp.eq.s32.totalorder %s30, 0
      %p267 = por %p265, %p266
      %s268 = ssub.s32 %s24, %s31
      %p269 = scmp.eq.s32.totalorder %s268, 0
      %s271 = sadd.s32 %s270, 1
      %s272 = scalar_select %p269, %s270, %s271
      %p275 = pneg %p269
      %p276 = scmp.eq.s32.totalorder %s24, 1
      %p277 = por %p275, %p276
      %p278 = scmp.ne.s32.totalorder %s270, %s273
      %p279 = scmp.eq.s32.totalorder %s24, 0
      %p280 = por %p278, %p279
      %p281 = scmp.ne.s32.totalorder %s270, %s273
      %p282 = scmp.eq.s32.totalorder %s29, 1
      %p283 = por %p281, %p282
      %p284 = scmp.ne.s32.totalorder %s273, %s274
      %p285 = scmp.eq.s32.totalorder %s29, 0
      %p286 = por %p284, %p285
      %p287 = scmp.ne.s32.totalorder %s273, %s274
      %p288 = scmp.eq.s32.totalorder %s30, 1
      %p289 = por %p287, %p288
      %p291 = scmp.ne.s32.totalorder %s274, %s290
      %p292 = scmp.eq.s32.totalorder %s30, 0
      %p293 = por %p291, %p292
      %s294 = ssub.s32 %s24, %s31
      %p295 = scmp.eq.s32.totalorder %s294, 0
      %s297 = sadd.s32 %s296, 1
      %s298 = scalar_select %p295, %s296, %s297
      %p301 = pneg %p295
      %p302 = scmp.eq.s32.totalorder %s24, 1
      %p303 = por %p301, %p302
      %p304 = scmp.ne.s32.totalorder %s296, %s299
      %p305 = scmp.eq.s32.totalorder %s24, 0
      %p306 = por %p304, %p305
      %p307 = scmp.ne.s32.totalorder %s296, %s299
      %p308 = scmp.eq.s32.totalorder %s29, 1
      %p309 = por %p307, %p308
      %p310 = scmp.ne.s32.totalorder %s299, %s300
      %p311 = scmp.eq.s32.totalorder %s29, 0
      %p312 = por %p310, %p311
      %p313 = scmp.ne.s32.totalorder %s299, %s300
      %p314 = scmp.eq.s32.totalorder %s30, 1
      %p315 = por %p313, %p314
      %p317 = scmp.ne.s32.totalorder %s300, %s316
      %p318 = scmp.eq.s32.totalorder %s30, 0
      %p319 = por %p317, %p318
      %p320 = scmp.le.s32.totalorder 1, %s24
      %p321 = scmp.lt.s32.totalorder %s24, 3
      %p322 = pnand %p320, %p321
      %p323 = pneg %p322
      // Predicated region
      $region9: #{discriminator_forward.1} parent=5 // pred_check
        _
      $region10: #{discriminator_forward.1} parent=5 // pred_check_branch
        %325 = sbr.rel (%p322) target = $region12
      $region11: #{discriminator_forward.1} parent=5 // pred_region
        %s326 = ssub.s32 %s24, 1
        // Predicated region
        $region13: #{discriminator_forward.1} parent=11 // pred_check
          %p327 = pneg %p71
        $region14: #{discriminator_forward.1} parent=11 // pred_check_branch
          %329 = sbr.rel (%p327) target = $region16
        $region15: #{discriminator_forward.1} parent=11 // pred_region
          _
        $region16: #{discriminator_forward.1} parent=11 // pred_fallthru
          _
        // Predicated region
        $region17: #{discriminator_forward.1} parent=11 // pred_check
          %p330 = pneg %p92
        $region18: #{discriminator_forward.1} parent=11 // pred_check_branch
          %332 = sbr.rel (%p330) target = $region20
        $region19: #{discriminator_forward.1} parent=11 // pred_region
          _
        $region20: #{discriminator_forward.1} parent=11 // pred_fallthru
          _
        // Predicated region
        $region21: #{discriminator_forward.1} parent=11 // pred_check
          %p333 = pneg %p113
        $region22: #{discriminator_forward.1} parent=11 // pred_check_branch
          %335 = sbr.rel (%p333) target = $region24
        $region23: #{discriminator_forward.1} parent=11 // pred_region
          _
        $region24: #{discriminator_forward.1} parent=11 // pred_fallthru
          _
        // Predicated region
        $region25: #{discriminator_forward.1} parent=11 // pred_check
          %p336 = pneg %p134
        $region26: #{discriminator_forward.1} parent=11 // pred_check_branch
          %338 = sbr.rel (%p336) target = $region28
        $region27: #{discriminator_forward.1} parent=11 // pred_region
          _
        $region28: #{discriminator_forward.1} parent=11 // pred_fallthru
          _
        // Predicated region
        $region29: #{discriminator_forward.1} parent=11 // pred_check
          %p339 = pneg %p155
        $region30: #{discriminator_forward.1} parent=11 // pred_check_branch
          %341 = sbr.rel (%p339) target = $region32
        $region31: #{discriminator_forward.1} parent=11 // pred_region
          _
        $region32: #{discriminator_forward.1} parent=11 // pred_fallthru
          _
        // Predicated region
        $region33: #{discriminator_forward.1} parent=11 // pred_check
          %p342 = pneg %p176
        $region34: #{discriminator_forward.1} parent=11 // pred_check_branch
          %344 = sbr.rel (%p342) target = $region36
        $region35: #{discriminator_forward.1} parent=11 // pred_region
          _
        $region36: #{discriminator_forward.1} parent=11 // pred_fallthru
          _
        // Predicated region
        $region37: #{discriminator_forward.1} parent=11 // pred_check
          %p345 = pneg %p197
        $region38: #{discriminator_forward.1} parent=11 // pred_check_branch
          %347 = sbr.rel (%p345) target = $region40
        $region39: #{discriminator_forward.1} parent=11 // pred_region
          _
        $region40: #{discriminator_forward.1} parent=11 // pred_fallthru
          _
        // Predicated region
        $region41: #{discriminator_forward.1} parent=11 // pred_check
          %p348 = pneg %p218
        $region42: #{discriminator_forward.1} parent=11 // pred_check_branch
          %350 = sbr.rel (%p348) target = $region44
        $region43: #{discriminator_forward.1} parent=11 // pred_region
          _
        $region44: #{discriminator_forward.1} parent=11 // pred_fallthru
          _
        // Predicated region
        $region45: #{discriminator_forward.1} parent=11 // pred_check
          %p351 = pneg %p239
        $region46: #{discriminator_forward.1} parent=11 // pred_check_branch
          %353 = sbr.rel (%p351) target = $region48
        $region47: #{discriminator_forward.1} parent=11 // pred_region
          _
        $region48: #{discriminator_forward.1} parent=11 // pred_fallthru
          _
        // Predicated region
        $region49: #{discriminator_forward.1} parent=11 // pred_check
          %p354 = pneg %p260
        $region50: #{discriminator_forward.1} parent=11 // pred_check_branch
          %356 = sbr.rel (%p354) target = $region52
        $region51: #{discriminator_forward.1} parent=11 // pred_region
          _
        $region52: #{discriminator_forward.1} parent=11 // pred_fallthru
          _
      $region12: #{discriminator_forward.1} parent=5 // pred_fallthru
        _
      %p357 = scmp.lt.s32.totalorder %s24, 2
      // Predicated region
      $region53: #{discriminator_forward.1} parent=5 // pred_check
        %p358 = pneg %p357
      $region54: #{discriminator_forward.1} parent=5 // pred_check_branch
        %360 = sbr.rel (%p358) target = $region56
      $region55: #{discriminator_forward.1} parent=5 // pred_region
        // Predicated region
        $region57: #{discriminator_forward.1} parent=55 // pred_check
          %p361 = pneg %p44
        $region58: #{discriminator_forward.1} parent=55 // pred_check_branch
          %363 = sbr.rel (%p361) target = $region60
        $region59: #{discriminator_forward.1} parent=55 // pred_region
          %p364 = scmp.lt.s32.totalorder %s24, 1
          %s365 = scalar_select %p364, %s24, 1
          %s366 = smul.addr %s365, 2
          %s367 = smul.addr %s366, 8
          %s368 = scalar_lea.vmem %s0, %s367
        $region60: #{discriminator_forward.1} parent=55 // pred_fallthru
          _
      $region56: #{discriminator_forward.1} parent=5 // pred_fallthru
        _
      %p369 = scmp.le.s32.totalorder 1, %s24
      %p370 = scmp.lt.s32.totalorder %s24, 3
      %p371 = pnand %p369, %p370
      %p372 = pneg %p371
      // Predicated region
      $region61: #{discriminator_forward.1} parent=5 // pred_check
        _
      $region62: #{discriminator_forward.1} parent=5 // pred_check_branch
        %374 = sbr.rel (%p371) target = $region64
      $region63: #{discriminator_forward.1} parent=5 // pred_region
        %s375 = ssub.s32 %s24, 1
        %p376 = scmp.lt.s32.totalorder %s29, 1
        %s377 = scalar_select %p376, %s29, 1
        %s378 = smul.addr %s377, 2
        %s379 = smul.addr %s378, 8
        %s380 = scalar_lea.vmem %s0, %s379
        %p381 = pneg %p50
        %p382 = pneg %p47
        %p383 = pneg %p71
        %p384 = pneg %p68
        %p385 = pneg %p92
        %p386 = pneg %p89
        %p387 = pneg %p113
        %p388 = pneg %p110
        %p389 = pneg %p134
        %p390 = pneg %p131
        %p391 = pneg %p155
        %p392 = pneg %p152
        %p393 = pneg %p176
        %p394 = pneg %p173
        %p395 = pneg %p197
        %p396 = pneg %p194
        %p397 = pneg %p218
        %p398 = pneg %p215
        %p399 = pneg %p239
        %p400 = pneg %p236
        %p401 = pneg %p260
        %p402 = pneg %p257
        %p403 = pneg %p286
        %p404 = pneg %p283
        %p405 = scmp.lt.s32.totalorder %s29, 1
        %s406 = scalar_select %p405, %s29, 1
        %s407 = scalar_lea.vmem %s11, %s406
        %p408 = pneg %p312
        %p409 = pneg %p309
        %s410 = sand.u32 %s299, 1
        %s411 = scalar_lea.sflag [#allocation4], %s410
        %s412 = sand.u32 %s299, 1
        %s413 = scalar_lea.vmem [#allocation3], %s412
        %p414 = scmp.lt.s32.totalorder %s29, 1
        %s415 = scalar_select %p414, %s29, 1
        %s416 = smul.addr %s415, 2
        %s417 = smul.addr %s416, 8
        %s418 = scalar_lea.vmem %s0, %s417
        %p419 = scmp.lt.s32.totalorder %s29, 1
        %s420 = scalar_select %p419, %s29, 1
        %s421 = scalar_lea.vmem %s11, %s420
        %v423 = vld [vmem:[%s418] sm:$0xff]
        %v424 = vld [vmem:[%s418 + $0x8] sm:$0xff]
        %v425 = vpack.c.bf16 %v423, %v423
        %v426 = vld [vmem:[%s1] sm:$0xff]
        %v427 = vld [vmem:[%s1 + $0x8] sm:$0xff]
        %v428 = vld [vmem:[%s1 + $0x10] sm:$0xff]
        %v429 = vld [vmem:[%s1 + $0x18] sm:$0xff]
        %v430 = vld [vmem:[%s1 + $0x20] sm:$0xff]
        %v431 = vld [vmem:[%s1 + $0x28] sm:$0xff]
        %v432 = vld [vmem:[%s1 + $0x30] sm:$0xff]
        %v433 = vld [vmem:[%s1 + $0x38] sm:$0xff]
        %v434 = vld [vmem:[%s1 + $0x40] sm:$0xff]
        %v435 = vld [vmem:[%s1 + $0x48] sm:$0xff]
        %v436 = vld [vmem:[%s1 + $0x50] sm:$0xff]
        %v437 = vld [vmem:[%s1 + $0x58] sm:$0xff]
        %v438 = vpack.c.bf16 %v424, %v424
        %s439 = scalar_lea.vmem %s1, 96
        %v440 = vld [vmem:[%s439] sm:$0xff]
        %v441 = vld [vmem:[%s439 + $0x8] sm:$0xff]
        %v442 = vld [vmem:[%s439 + $0x10] sm:$0xff]
        %v443 = vld [vmem:[%s439 + $0x18] sm:$0xff]
        %v444 = vld [vmem:[%s439 + $0x20] sm:$0xff]
        %v445 = vld [vmem:[%s439 + $0x28] sm:$0xff]
        %v446 = vld [vmem:[%s439 + $0x30] sm:$0xff]
        %v447 = vld [vmem:[%s439 + $0x38] sm:$0xff]
        %v448 = vld [vmem:[%s439 + $0x40] sm:$0xff]
        %v449 = vld [vmem:[%s439 + $0x48] sm:$0xff]
        %v450 = vld [vmem:[%s439 + $0x50] sm:$0xff]
        %v451 = vld [vmem:[%s439 + $0x58] sm:$0xff]
        %v464 = vunpack.c.l.b16 %v440
        %v465 = vunpack.c.h.b16 %v440
        %v466 = vunpack.c.l.b16 %v441
        %v467 = vunpack.c.h.b16 %v441
        %v468 = vunpack.c.l.b16 %v442
        %v469 = vunpack.c.h.b16 %v442
        %v470 = vunpack.c.l.b16 %v443
        %v471 = vunpack.c.h.b16 %v443
        %v472 = vunpack.c.l.b16 %v444
        %v473 = vunpack.c.h.b16 %v444
        %v474 = vunpack.c.l.b16 %v445
        %v475 = vunpack.c.h.b16 %v445
        %v476 = vunpack.c.l.b16 %v446
        %v477 = vunpack.c.h.b16 %v446
        %v478 = vunpack.c.l.b16 %v447
        %v479 = vunpack.c.h.b16 %v447
        %v480 = vunpack.c.l.b16 %v448
        %v481 = vunpack.c.h.b16 %v448
        %v482 = vunpack.c.l.b16 %v449
        %v483 = vunpack.c.h.b16 %v449
        %v484 = vunpack.c.l.b16 %v450
        %v485 = vunpack.c.h.b16 %v450
        %v486 = vunpack.c.l.b16 %v451
        %v487 = vunpack.c.h.b16 %v451
        %v488 = vpack.c.b16 %v468, %v464
        %v489 = vpack.c.b16 %v469, %v465
        %v490 = vpack.c.b16 %v470, %v466
        %v491 = vpack.c.b16 %v471, %v467
        %v492 = vpack.c.b16 %v476, %v472
        %v493 = vpack.c.b16 %v477, %v473
        %v494 = vpack.c.b16 %v478, %v474
        %v495 = vpack.c.b16 %v479, %v475
        %v496 = vpack.c.b16 %v484, %v480
        %v497 = vpack.c.b16 %v485, %v481
        %v498 = vpack.c.b16 %v486, %v482
        %v499 = vpack.c.b16 %v487, %v483
        %vm512 = vcmask 392192
        %v514 = vsel %vm512, %v438, 0
        %516 = vmatprep.subr.bf16.mxu0 0
        %517 = vmatpush1.bf16.msra.mxu0 0
        %518 = vmatprep.subr.bf16.mxu0 0
        %519 = vmatpush1.bf16.msra.mxu0 0
        %520 = vmatprep.subr.bf16.mxu0 0
        %521 = vmatpush1.bf16.msra.mxu0 0
        %522 = vmatprep.subr.bf16.mxu0 0
        %523 = vmatpush1.bf16.msra.mxu0 0
        %524 = vmatprep.subr.bf16.mxu0 0
        %525 = vmatpush1.bf16.msra.mxu0 0
        %526 = vmatprep.subr.bf16.mxu0 %v497
        %527 = vmatpush1.bf16.msra.mxu0 %v496
        %528 = vmatprep.subr.bf16.mxu0 %v493
        %529 = vmatpush1.bf16.msra.mxu0 %v492
        %530 = vmatprep.subr.bf16.mxu0 %v489
        %531 = vmatpush1.bf16.msra.mxu0 %v488
        %532 = vmatprep.subr.bf16.mxu0 0
        %533 = vmatpush2.bf16.msra.mxu0 0
        %534 = vmatprep.subr.bf16.mxu0 0
        %535 = vmatpush2.bf16.msra.mxu0 0
        %536 = vmatprep.subr.bf16.mxu0 0
        %537 = vmatpush2.bf16.msra.mxu0 0
        %538 = vmatprep.subr.bf16.mxu0 0
        %539 = vmatpush2.bf16.msra.mxu0 0
        %540 = vmatprep.subr.bf16.mxu0 0
        %541 = vmatpush2.bf16.msra.mxu0 0
        %542 = vmatprep.subr.bf16.mxu0 0
        %543 = vmatpush2.bf16.msra.mxu0 0
        %544 = vmatprep.subr.bf16.mxu0 0
        %545 = vmatpush2.bf16.msra.mxu0 0
        %546 = vmatprep.subr.bf16.mxu0 0
        %547 = vmatpush2.bf16.msra.mxu0 0
        %548 = vmatprep.mubr.bf16.mxu0 0
        %549 = vmatmul.mubr.bf16.gmra.mxu0 %v514
        %v550 = vpop.f32.mrf.mxu0
        %v551 = vadd.f32 0.0, %v550
        %v552 = vpop.f32.mrf.mxu0
        %v553 = vadd.f32 0.0, %v552
        %v554 = vpop.f32.mrf.mxu0
        %v555 = vpop.f32.mrf.mxu0
        %556 = vdwg.mxu0
        %557 = vmatprep.subr.bf16.mxu0 0
        %558 = vmatpush1.bf16.msra.mxu0 0
        %559 = vmatprep.subr.bf16.mxu0 0
        %560 = vmatpush1.bf16.msra.mxu0 0
        %561 = vmatprep.subr.bf16.mxu0 0
        %562 = vmatpush1.bf16.msra.mxu0 0
        %563 = vmatprep.subr.bf16.mxu0 0
        %564 = vmatpush1.bf16.msra.mxu0 0
        %565 = vmatprep.subr.bf16.mxu0 0
        %566 = vmatpush1.bf16.msra.mxu0 0
        %567 = vmatprep.subr.bf16.mxu0 %v499
        %568 = vmatpush1.bf16.msra.mxu0 %v498
        %569 = vmatprep.subr.bf16.mxu0 %v495
        %570 = vmatpush1.bf16.msra.mxu0 %v494
        %571 = vmatprep.subr.bf16.mxu0 %v491
        %572 = vmatpush1.bf16.msra.mxu0 %v490
        %573 = vmatprep.subr.bf16.mxu0 0
        %574 = vmatpush2.bf16.msra.mxu0 0
        %575 = vmatprep.subr.bf16.mxu0 0
        %576 = vmatpush2.bf16.msra.mxu0 0
        %577 = vmatprep.subr.bf16.mxu0 0
        %578 = vmatpush2.bf16.msra.mxu0 0
        %579 = vmatprep.subr.bf16.mxu0 0
        %580 = vmatpush2.bf16.msra.mxu0 0
        %581 = vmatprep.subr.bf16.mxu0 0
        %582 = vmatpush2.bf16.msra.mxu0 0
        %583 = vmatprep.subr.bf16.mxu0 0
        %584 = vmatpush2.bf16.msra.mxu0 0
        %585 = vmatprep.subr.bf16.mxu0 0
        %586 = vmatpush2.bf16.msra.mxu0 0
        %587 = vmatprep.subr.bf16.mxu0 0
        %588 = vmatpush2.bf16.msra.mxu0 0
        %589 = vmatprep.mubr.bf16.mxu0 0
        %590 = vmatmul.mubr.bf16.gmra.mxu0 %v514
        %v591 = vpop.f32.mrf.mxu0
        %v592 = vadd.f32 0.0, %v591
        %v593 = vpop.f32.mrf.mxu0
        %v594 = vadd.f32 0.0, %v593
        %v595 = vpop.f32.mrf.mxu0
        %v596 = vpop.f32.mrf.mxu0
        %597 = vdwg.mxu0
        %v610 = vunpack.c.l.b16 %v426
        %v611 = vunpack.c.h.b16 %v426
        %v612 = vunpack.c.l.b16 %v427
        %v613 = vunpack.c.h.b16 %v427
        %v614 = vunpack.c.l.b16 %v428
        %v615 = vunpack.c.h.b16 %v428
        %v616 = vunpack.c.l.b16 %v429
        %v617 = vunpack.c.h.b16 %v429
        %v618 = vunpack.c.l.b16 %v430
        %v619 = vunpack.c.h.b16 %v430
        %v620 = vunpack.c.l.b16 %v431
        %v621 = vunpack.c.h.b16 %v431
        %v622 = vunpack.c.l.b16 %v432
        %v623 = vunpack.c.h.b16 %v432
        %v624 = vunpack.c.l.b16 %v433
        %v625 = vunpack.c.h.b16 %v433
        %v626 = vunpack.c.l.b16 %v434
        %v627 = vunpack.c.h.b16 %v434
        %v628 = vunpack.c.l.b16 %v435
        %v629 = vunpack.c.h.b16 %v435
        %v630 = vunpack.c.l.b16 %v436
        %v631 = vunpack.c.h.b16 %v436
        %v632 = vunpack.c.l.b16 %v437
        %v633 = vunpack.c.h.b16 %v437
        %v634 = vpack.c.b16 %v614, %v610
        %v635 = vpack.c.b16 %v615, %v611
        %v636 = vpack.c.b16 %v616, %v612
        %v637 = vpack.c.b16 %v617, %v613
        %v638 = vpack.c.b16 %v622, %v618
        %v639 = vpack.c.b16 %v623, %v619
        %v640 = vpack.c.b16 %v624, %v620
        %v641 = vpack.c.b16 %v625, %v621
        %v642 = vpack.c.b16 %v630, %v626
        %v643 = vpack.c.b16 %v631, %v627
        %v644 = vpack.c.b16 %v632, %v628
        %v645 = vpack.c.b16 %v633, %v629
        %v659 = vsel %vm512, %v425, 0
        %661 = vmatprep.subr.bf16.mxu0 0
        %662 = vmatpush1.bf16.msra.mxu0 0
        %663 = vmatprep.subr.bf16.mxu0 0
        %664 = vmatpush1.bf16.msra.mxu0 0
        %665 = vmatprep.subr.bf16.mxu0 0
        %666 = vmatpush1.bf16.msra.mxu0 0
        %667 = vmatprep.subr.bf16.mxu0 0
        %668 = vmatpush1.bf16.msra.mxu0 0
        %669 = vmatprep.subr.bf16.mxu0 0
        %670 = vmatpush1.bf16.msra.mxu0 0
        %671 = vmatprep.subr.bf16.mxu0 %v643
        %672 = vmatpush1.bf16.msra.mxu0 %v642
        %673 = vmatprep.subr.bf16.mxu0 %v639
        %674 = vmatpush1.bf16.msra.mxu0 %v638
        %675 = vmatprep.subr.bf16.mxu0 %v635
        %676 = vmatpush1.bf16.msra.mxu0 %v634
        %677 = vmatprep.subr.bf16.mxu0 0
        %678 = vmatpush2.bf16.msra.mxu0 0
        %679 = vmatprep.subr.bf16.mxu0 0
        %680 = vmatpush2.bf16.msra.mxu0 0
        %681 = vmatprep.subr.bf16.mxu0 0
        %682 = vmatpush2.bf16.msra.mxu0 0
        %683 = vmatprep.subr.bf16.mxu0 0
        %684 = vmatpush2.bf16.msra.mxu0 0
        %685 = vmatprep.subr.bf16.mxu0 0
        %686 = vmatpush2.bf16.msra.mxu0 0
        %687 = vmatprep.subr.bf16.mxu0 0
        %688 = vmatpush2.bf16.msra.mxu0 0
        %689 = vmatprep.subr.bf16.mxu0 0
        %690 = vmatpush2.bf16.msra.mxu0 0
        %691 = vmatprep.subr.bf16.mxu0 0
        %692 = vmatpush2.bf16.msra.mxu0 0
        %693 = vmatprep.mubr.bf16.mxu0 0
        %694 = vmatmul.mubr.bf16.gmra.mxu0 %v659
        %v695 = vpop.f32.mrf.mxu0
        %v696 = vadd.f32 %v551, %v695
        %v697 = vpop.f32.mrf.mxu0
        %v698 = vadd.f32 %v553, %v697
        %v699 = vpop.f32.mrf.mxu0
        %v700 = vpop.f32.mrf.mxu0
        %701 = vdwg.mxu0
        %702 = vmatprep.subr.bf16.mxu0 0
        %703 = vmatpush1.bf16.msra.mxu0 0
        %704 = vmatprep.subr.bf16.mxu0 0
        %705 = vmatpush1.bf16.msra.mxu0 0
        %706 = vmatprep.subr.bf16.mxu0 0
        %707 = vmatpush1.bf16.msra.mxu0 0
        %708 = vmatprep.subr.bf16.mxu0 0
        %709 = vmatpush1.bf16.msra.mxu0 0
        %710 = vmatprep.subr.bf16.mxu0 0
        %711 = vmatpush1.bf16.msra.mxu0 0
        %712 = vmatprep.subr.bf16.mxu0 %v645
        %713 = vmatpush1.bf16.msra.mxu0 %v644
        %714 = vmatprep.subr.bf16.mxu0 %v641
        %715 = vmatpush1.bf16.msra.mxu0 %v640
        %716 = vmatprep.subr.bf16.mxu0 %v637
        %717 = vmatpush1.bf16.msra.mxu0 %v636
        %718 = vmatprep.subr.bf16.mxu0 0
        %719 = vmatpush2.bf16.msra.mxu0 0
        %720 = vmatprep.subr.bf16.mxu0 0
        %721 = vmatpush2.bf16.msra.mxu0 0
        %722 = vmatprep.subr.bf16.mxu0 0
        %723 = vmatpush2.bf16.msra.mxu0 0
        %724 = vmatprep.subr.bf16.mxu0 0
        %725 = vmatpush2.bf16.msra.mxu0 0
        %726 = vmatprep.subr.bf16.mxu0 0
        %727 = vmatpush2.bf16.msra.mxu0 0
        %728 = vmatprep.subr.bf16.mxu0 0
        %729 = vmatpush2.bf16.msra.mxu0 0
        %730 = vmatprep.subr.bf16.mxu0 0
        %731 = vmatpush2.bf16.msra.mxu0 0
        %732 = vmatprep.subr.bf16.mxu0 0
        %733 = vmatpush2.bf16.msra.mxu0 0
        %734 = vmatprep.mubr.bf16.mxu0 0
        %735 = vmatmul.mubr.bf16.gmra.mxu0 %v659
        %v736 = vpop.f32.mrf.mxu0
        %v737 = vadd.f32 %v592, %v736
        %v738 = vpop.f32.mrf.mxu0
        %v739 = vadd.f32 %v594, %v738
        %v740 = vpop.f32.mrf.mxu0
        %v741 = vpop.f32.mrf.mxu0
        %742 = vdwg.mxu0
        %s743 = scalar_lea.vmem %s1, 192
        %v744 = vld [vmem:[%s743] sm:$0xff]
        %v745 = vld [vmem:[%s743 + $0x8] sm:$0xff]
        %v746 = vld [vmem:[%s743 + $0x10] sm:$0xff]
        %v747 = vld [vmem:[%s743 + $0x18] sm:$0xff]
        %v748 = vld [vmem:[%s743 + $0x20] sm:$0xff]
        %v749 = vld [vmem:[%s743 + $0x28] sm:$0xff]
        %v750 = vld [vmem:[%s743 + $0x30] sm:$0xff]
        %v751 = vld [vmem:[%s743 + $0x38] sm:$0xff]
        %v752 = vld [vmem:[%s743 + $0x40] sm:$0xff]
        %v753 = vld [vmem:[%s743 + $0x48] sm:$0xff]
        %v754 = vld [vmem:[%s743 + $0x50] sm:$0xff]
        %v755 = vld [vmem:[%s743 + $0x58] sm:$0xff]
        %v756 = vshrl.u32 %v425, 16
        %v758 = vshll.u32 %v425, 16
        %v760 = vrot.slane %v758, 1
        %v761 = vor.u32 %v756, %v760
        %v774 = vunpack.c.l.b16 %v744
        %v775 = vunpack.c.h.b16 %v744
        %v776 = vunpack.c.l.b16 %v745
        %v777 = vunpack.c.h.b16 %v745
        %v778 = vunpack.c.l.b16 %v746
        %v779 = vunpack.c.h.b16 %v746
        %v780 = vunpack.c.l.b16 %v747
        %v781 = vunpack.c.h.b16 %v747
        %v782 = vunpack.c.l.b16 %v748
        %v783 = vunpack.c.h.b16 %v748
        %v784 = vunpack.c.l.b16 %v749
        %v785 = vunpack.c.h.b16 %v749
        %v786 = vunpack.c.l.b16 %v750
        %v787 = vunpack.c.h.b16 %v750
        %v788 = vunpack.c.l.b16 %v751
        %v789 = vunpack.c.h.b16 %v751
        %v790 = vunpack.c.l.b16 %v752
        %v791 = vunpack.c.h.b16 %v752
        %v792 = vunpack.c.l.b16 %v753
        %v793 = vunpack.c.h.b16 %v753
        %v794 = vunpack.c.l.b16 %v754
        %v795 = vunpack.c.h.b16 %v754
        %v796 = vunpack.c.l.b16 %v755
        %v797 = vunpack.c.h.b16 %v755
        %v798 = vpack.c.b16 %v778, %v774
        %v799 = vpack.c.b16 %v779, %v775
        %v800 = vpack.c.b16 %v780, %v776
        %v801 = vpack.c.b16 %v781, %v777
        %v802 = vpack.c.b16 %v786, %v782
        %v803 = vpack.c.b16 %v787, %v783
        %v804 = vpack.c.b16 %v788, %v784
        %v805 = vpack.c.b16 %v789, %v785
        %v806 = vpack.c.b16 %v794, %v790
        %v807 = vpack.c.b16 %v795, %v791
        %v808 = vpack.c.b16 %v796, %v792
        %v809 = vpack.c.b16 %v797, %v793
        %v823 = vsel %vm512, %v761, 0
        %825 = vmatprep.subr.bf16.mxu0 0
        %826 = vmatpush1.bf16.msra.mxu0 0
        %827 = vmatprep.subr.bf16.mxu0 0
        %828 = vmatpush1.bf16.msra.mxu0 0
        %829 = vmatprep.subr.bf16.mxu0 0
        %830 = vmatpush1.bf16.msra.mxu0 0
        %831 = vmatprep.subr.bf16.mxu0 0
        %832 = vmatpush1.bf16.msra.mxu0 0
        %833 = vmatprep.subr.bf16.mxu0 0
        %834 = vmatpush1.bf16.msra.mxu0 0
        %835 = vmatprep.subr.bf16.mxu0 %v807
        %836 = vmatpush1.bf16.msra.mxu0 %v806
        %837 = vmatprep.subr.bf16.mxu0 %v803
        %838 = vmatpush1.bf16.msra.mxu0 %v802
        %839 = vmatprep.subr.bf16.mxu0 %v799
        %840 = vmatpush1.bf16.msra.mxu0 %v798
        %841 = vmatprep.subr.bf16.mxu0 0
        %842 = vmatpush2.bf16.msra.mxu0 0
        %843 = vmatprep.subr.bf16.mxu0 0
        %844 = vmatpush2.bf16.msra.mxu0 0
        %845 = vmatprep.subr.bf16.mxu0 0
        %846 = vmatpush2.bf16.msra.mxu0 0
        %847 = vmatprep.subr.bf16.mxu0 0
        %848 = vmatpush2.bf16.msra.mxu0 0
        %849 = vmatprep.subr.bf16.mxu0 0
        %850 = vmatpush2.bf16.msra.mxu0 0
        %851 = vmatprep.subr.bf16.mxu0 0
        %852 = vmatpush2.bf16.msra.mxu0 0
        %853 = vmatprep.subr.bf16.mxu0 0
        %854 = vmatpush2.bf16.msra.mxu0 0
        %855 = vmatprep.subr.bf16.mxu0 0
        %856 = vmatpush2.bf16.msra.mxu0 0
        %857 = vmatprep.mubr.bf16.mxu0 0
        %858 = vmatmul.mubr.bf16.gmra.mxu0 %v823
        %v859 = vpop.f32.mrf.mxu0
        %v860 = vadd.f32 0.0, %v859
        %v861 = vpop.f32.mrf.mxu0
        %v862 = vadd.f32 0.0, %v861
        %v863 = vpop.f32.mrf.mxu0
        %v864 = vpop.f32.mrf.mxu0
        %865 = vdwg.mxu0
        %866 = vmatprep.subr.bf16.mxu0 0
        %867 = vmatpush1.bf16.msra.mxu0 0
        %868 = vmatprep.subr.bf16.mxu0 0
        %869 = vmatpush1.bf16.msra.mxu0 0
        %870 = vmatprep.subr.bf16.mxu0 0
        %871 = vmatpush1.bf16.msra.mxu0 0
        %872 = vmatprep.subr.bf16.mxu0 0
        %873 = vmatpush1.bf16.msra.mxu0 0
        %874 = vmatprep.subr.bf16.mxu0 0
        %875 = vmatpush1.bf16.msra.mxu0 0
        %876 = vmatprep.subr.bf16.mxu0 %v809
        %877 = vmatpush1.bf16.msra.mxu0 %v808
        %878 = vmatprep.subr.bf16.mxu0 %v805
        %879 = vmatpush1.bf16.msra.mxu0 %v804
        %880 = vmatprep.subr.bf16.mxu0 %v801
        %881 = vmatpush1.bf16.msra.mxu0 %v800
        %882 = vmatprep.subr.bf16.mxu0 0
        %883 = vmatpush2.bf16.msra.mxu0 0
        %884 = vmatprep.subr.bf16.mxu0 0
        %885 = vmatpush2.bf16.msra.mxu0 0
        %886 = vmatprep.subr.bf16.mxu0 0
        %887 = vmatpush2.bf16.msra.mxu0 0
        %888 = vmatprep.subr.bf16.mxu0 0
        %889 = vmatpush2.bf16.msra.mxu0 0
        %890 = vmatprep.subr.bf16.mxu0 0
        %891 = vmatpush2.bf16.msra.mxu0 0
        %892 = vmatprep.subr.bf16.mxu0 0
        %893 = vmatpush2.bf16.msra.mxu0 0
        %894 = vmatprep.subr.bf16.mxu0 0
        %895 = vmatpush2.bf16.msra.mxu0 0
        %896 = vmatprep.subr.bf16.mxu0 0
        %897 = vmatpush2.bf16.msra.mxu0 0
        %898 = vmatprep.mubr.bf16.mxu0 0
        %899 = vmatmul.mubr.bf16.gmra.mxu0 %v823
        %v900 = vpop.f32.mrf.mxu0
        %v901 = vadd.f32 0.0, %v900
        %v902 = vpop.f32.mrf.mxu0
        %v903 = vadd.f32 0.0, %v902
        %v904 = vpop.f32.mrf.mxu0
        %v905 = vpop.f32.mrf.mxu0
        %906 = vdwg.mxu0
        %v907 = vadd.f32 %v696, %v860
        %v908 = vadd.f32 %v698, %v862
        %v909 = vadd.f32 %v737, %v901
        %v910 = vadd.f32 %v739, %v903
        %s911 = scalar_lea.vmem %s1, 288
        %v912 = vld [vmem:[%s911] sm:$0xff]
        %v913 = vld [vmem:[%s911 + $0x8] sm:$0xff]
        %v914 = vld [vmem:[%s911 + $0x10] sm:$0xff]
        %v915 = vld [vmem:[%s911 + $0x18] sm:$0xff]
        %v916 = vld [vmem:[%s911 + $0x20] sm:$0xff]
        %v917 = vld [vmem:[%s911 + $0x28] sm:$0xff]
        %v918 = vld [vmem:[%s911 + $0x30] sm:$0xff]
        %v919 = vld [vmem:[%s911 + $0x38] sm:$0xff]
        %v920 = vld [vmem:[%s911 + $0x40] sm:$0xff]
        %v921 = vld [vmem:[%s911 + $0x48] sm:$0xff]
        %v922 = vld [vmem:[%s911 + $0x50] sm:$0xff]
        %v923 = vld [vmem:[%s911 + $0x58] sm:$0xff]
        %v924 = vshrl.u32 %v438, 16
        %v926 = vshll.u32 %v438, 16
        %v928 = vrot.slane %v926, 1
        %v929 = vor.u32 %v924, %v928
        %v942 = vunpack.c.l.b16 %v912
        %v943 = vunpack.c.h.b16 %v912
        %v944 = vunpack.c.l.b16 %v913
        %v945 = vunpack.c.h.b16 %v913
        %v946 = vunpack.c.l.b16 %v914
        %v947 = vunpack.c.h.b16 %v914
        %v948 = vunpack.c.l.b16 %v915
        %v949 = vunpack.c.h.b16 %v915
        %v950 = vunpack.c.l.b16 %v916
        %v951 = vunpack.c.h.b16 %v916
        %v952 = vunpack.c.l.b16 %v917
        %v953 = vunpack.c.h.b16 %v917
        %v954 = vunpack.c.l.b16 %v918
        %v955 = vunpack.c.h.b16 %v918
        %v956 = vunpack.c.l.b16 %v919
        %v957 = vunpack.c.h.b16 %v919
        %v958 = vunpack.c.l.b16 %v920
        %v959 = vunpack.c.h.b16 %v920
        %v960 = vunpack.c.l.b16 %v921
        %v961 = vunpack.c.h.b16 %v921
        %v962 = vunpack.c.l.b16 %v922
        %v963 = vunpack.c.h.b16 %v922
        %v964 = vunpack.c.l.b16 %v923
        %v965 = vunpack.c.h.b16 %v923
        %v966 = vpack.c.b16 %v946, %v942
        %v967 = vpack.c.b16 %v947, %v943
        %v968 = vpack.c.b16 %v948, %v944
        %v969 = vpack.c.b16 %v949, %v945
        %v970 = vpack.c.b16 %v954, %v950
        %v971 = vpack.c.b16 %v955, %v951
        %v972 = vpack.c.b16 %v956, %v952
        %v973 = vpack.c.b16 %v957, %v953
        %v974 = vpack.c.b16 %v962, %v958
        %v975 = vpack.c.b16 %v963, %v959
        %v976 = vpack.c.b16 %v964, %v960
        %v977 = vpack.c.b16 %v965, %v961
        %v991 = vsel %vm512, %v929, 0
        %993 = vmatprep.subr.bf16.mxu0 0
        %994 = vmatpush1.bf16.msra.mxu0 0
        %995 = vmatprep.subr.bf16.mxu0 0
        %996 = vmatpush1.bf16.msra.mxu0 0
        %997 = vmatprep.subr.bf16.mxu0 0
        %998 = vmatpush1.bf16.msra.mxu0 0
        %999 = vmatprep.subr.bf16.mxu0 0
        %1000 = vmatpush1.bf16.msra.mxu0 0
        %1001 = vmatprep.subr.bf16.mxu0 0
        %1002 = vmatpush1.bf16.msra.mxu0 0
        %1003 = vmatprep.subr.bf16.mxu0 %v975
        %1004 = vmatpush1.bf16.msra.mxu0 %v974
        %1005 = vmatprep.subr.bf16.mxu0 %v971
        %1006 = vmatpush1.bf16.msra.mxu0 %v970
        %1007 = vmatprep.subr.bf16.mxu0 %v967
        %1008 = vmatpush1.bf16.msra.mxu0 %v966
        %1009 = vmatprep.subr.bf16.mxu0 0
        %1010 = vmatpush2.bf16.msra.mxu0 0
        %1011 = vmatprep.subr.bf16.mxu0 0
        %1012 = vmatpush2.bf16.msra.mxu0 0
        %1013 = vmatprep.subr.bf16.mxu0 0
        %1014 = vmatpush2.bf16.msra.mxu0 0
        %1015 = vmatprep.subr.bf16.mxu0 0
        %1016 = vmatpush2.bf16.msra.mxu0 0
        %1017 = vmatprep.subr.bf16.mxu0 0
        %1018 = vmatpush2.bf16.msra.mxu0 0
        %1019 = vmatprep.subr.bf16.mxu0 0
        %1020 = vmatpush2.bf16.msra.mxu0 0
        %1021 = vmatprep.subr.bf16.mxu0 0
        %1022 = vmatpush2.bf16.msra.mxu0 0
        %1023 = vmatprep.subr.bf16.mxu0 0
        %1024 = vmatpush2.bf16.msra.mxu0 0
        %1025 = vmatprep.mubr.bf16.mxu0 0
        %1026 = vmatmul.mubr.bf16.gmra.mxu0 %v991
        %v1027 = vpop.f32.mrf.mxu0
        %v1028 = vadd.f32 0.0, %v1027
        %v1029 = vpop.f32.mrf.mxu0
        %v1030 = vadd.f32 0.0, %v1029
        %v1031 = vpop.f32.mrf.mxu0
        %v1032 = vpop.f32.mrf.mxu0
        %1033 = vdwg.mxu0
        %1034 = vmatprep.subr.bf16.mxu0 0
        %1035 = vmatpush1.bf16.msra.mxu0 0
        %1036 = vmatprep.subr.bf16.mxu0 0
        %1037 = vmatpush1.bf16.msra.mxu0 0
        %1038 = vmatprep.subr.bf16.mxu0 0
        %1039 = vmatpush1.bf16.msra.mxu0 0
        %1040 = vmatprep.subr.bf16.mxu0 0
        %1041 = vmatpush1.bf16.msra.mxu0 0
        %1042 = vmatprep.subr.bf16.mxu0 0
        %1043 = vmatpush1.bf16.msra.mxu0 0
        %1044 = vmatprep.subr.bf16.mxu0 %v977
        %1045 = vmatpush1.bf16.msra.mxu0 %v976
        %1046 = vmatprep.subr.bf16.mxu0 %v973
        %1047 = vmatpush1.bf16.msra.mxu0 %v972
        %1048 = vmatprep.subr.bf16.mxu0 %v969
        %1049 = vmatpush1.bf16.msra.mxu0 %v968
        %1050 = vmatprep.subr.bf16.mxu0 0
        %1051 = vmatpush2.bf16.msra.mxu0 0
        %1052 = vmatprep.subr.bf16.mxu0 0
        %1053 = vmatpush2.bf16.msra.mxu0 0
        %1054 = vmatprep.subr.bf16.mxu0 0
        %1055 = vmatpush2.bf16.msra.mxu0 0
        %1056 = vmatprep.subr.bf16.mxu0 0
        %1057 = vmatpush2.bf16.msra.mxu0 0
        %1058 = vmatprep.subr.bf16.mxu0 0
        %1059 = vmatpush2.bf16.msra.mxu0 0
        %1060 = vmatprep.subr.bf16.mxu0 0
        %1061 = vmatpush2.bf16.msra.mxu0 0
        %1062 = vmatprep.subr.bf16.mxu0 0
        %1063 = vmatpush2.bf16.msra.mxu0 0
        %1064 = vmatprep.subr.bf16.mxu0 0
        %1065 = vmatpush2.bf16.msra.mxu0 0
        %1066 = vmatprep.mubr.bf16.mxu0 0
        %1067 = vmatmul.mubr.bf16.gmra.mxu0 %v991
        %v1068 = vpop.f32.mrf.mxu0
        %v1069 = vadd.f32 0.0, %v1068
        %v1070 = vpop.f32.mrf.mxu0
        %v1071 = vadd.f32 0.0, %v1070
        %v1072 = vpop.f32.mrf.mxu0
        %v1073 = vpop.f32.mrf.mxu0
        %1074 = vdwg.mxu0
        %v1075 = vadd.f32 %v907, %v1028
        %v1076 = vadd.f32 %v908, %v1030
        %v1077 = vadd.f32 %v909, %v1069
        %v1078 = vadd.f32 %v910, %v1071
        %v1079 = vld [vmem:[%s2] sm:$0xf]
        %v1081 = vlaneseq
        %v1082 = vshrl.u32 %v1081, 7
        %v1083 = vsub.s32 0, %v1082
        %v1084 = vrot.slane %v1079, %v1083
        %v1085 = vlaneseq
        %v1086 = vshrl.u32 %v1085, 7
        %v1087 = vsub.s32 1, %v1086
        %v1088 = vrot.slane %v1079, %v1087
        %v1089 = vlaneseq
        %v1090 = vshrl.u32 %v1089, 7
        %v1091 = vsub.s32 2, %v1090
        %v1092 = vrot.slane %v1079, %v1091
        %v1093 = vlaneseq
        %v1094 = vshrl.u32 %v1093, 7
        %v1095 = vsub.s32 3, %v1094
        %v1096 = vrot.slane %v1079, %v1095
        %v1101 = vadd.f32 %v1075, %v1084
        %v1102 = vadd.f32 %v1076, %v1088
        %v1103 = vadd.f32 %v1077, %v1092
        %v1104 = vadd.f32 %v1078, %v1096
        %v1105 = vmax.f32 %v1101, 0.0
        %v1106 = vmax.f32 %v1102, 0.0
        %v1107 = vmax.f32 %v1103, 0.0
        %v1108 = vmax.f32 %v1104, 0.0
        %v1109 = vpack.c.bf16 %v1105, %v1105
        %v1110 = vpack.c.bf16 %v1106, %v1106
        %v1111 = vpack.c.bf16 %v1107, %v1107
        %v1112 = vpack.c.bf16 %v1108, %v1108
        %v1113 = vld [vmem:[%s3] sm:$0xf]
        %v1114 = vld [vmem:[%s3 + $0x4] sm:$0xf]
        %v1115 = vld [vmem:[%s3 + $0x8] sm:$0xf]
        %v1116 = vld [vmem:[%s3 + $0xc] sm:$0xf]
        %v1117 = vld [vmem:[%s3 + $0x10] sm:$0xf]
        %v1118 = vld [vmem:[%s3 + $0x14] sm:$0xf]
        %v1119 = vld [vmem:[%s3 + $0x18] sm:$0xf]
        %v1120 = vld [vmem:[%s3 + $0x1c] sm:$0xf]
        %v1121 = vld [vmem:[%s3 + $0x20] sm:$0xf]
        %v1122 = vld [vmem:[%s3 + $0x24] sm:$0xf]
        %v1123 = vld [vmem:[%s3 + $0x28] sm:$0xf]
        %v1124 = vld [vmem:[%s3 + $0x2c] sm:$0xf]
        %v1125 = vld [vmem:[%s3 + $0x30] sm:$0xf]
        %v1126 = vld [vmem:[%s3 + $0x34] sm:$0xf]
        %v1127 = vld [vmem:[%s3 + $0x38] sm:$0xf]
        %v1128 = vld [vmem:[%s3 + $0x3c] sm:$0xf]
        %v1129 = vld [vmem:[%s3 + $0x40] sm:$0xf]
        %v1130 = vld [vmem:[%s3 + $0x44] sm:$0xf]
        %v1131 = vld [vmem:[%s3 + $0x48] sm:$0xf]
        %v1132 = vld [vmem:[%s3 + $0x4c] sm:$0xf]
        %v1133 = vld [vmem:[%s3 + $0x50] sm:$0xf]
        %v1134 = vld [vmem:[%s3 + $0x54] sm:$0xf]
        %v1135 = vld [vmem:[%s3 + $0x58] sm:$0xf]
        %v1136 = vld [vmem:[%s3 + $0x5c] sm:$0xf]
        %v1137 = vld [vmem:[%s3 + $0x60] sm:$0xf]
        %v1138 = vld [vmem:[%s3 + $0x64] sm:$0xf]
        %v1139 = vld [vmem:[%s3 + $0x68] sm:$0xf]
        %v1140 = vld [vmem:[%s3 + $0x6c] sm:$0xf]
        %v1141 = vld [vmem:[%s3 + $0x70] sm:$0xf]
        %v1142 = vld [vmem:[%s3 + $0x74] sm:$0xf]
        %v1143 = vld [vmem:[%s3 + $0x78] sm:$0xf]
        %v1144 = vld [vmem:[%s3 + $0x7c] sm:$0xf]
        %v1145 = vld [vmem:[%s3 + $0x80] sm:$0xf]
        %v1146 = vld [vmem:[%s3 + $0x84] sm:$0xf]
        %v1147 = vld [vmem:[%s3 + $0x88] sm:$0xf]
        %v1148 = vld [vmem:[%s3 + $0x8c] sm:$0xf]
        %v1149 = vld [vmem:[%s3 + $0x90] sm:$0xf]
        %v1150 = vld [vmem:[%s3 + $0x94] sm:$0xf]
        %v1151 = vld [vmem:[%s3 + $0x98] sm:$0xf]
        %v1152 = vld [vmem:[%s3 + $0x9c] sm:$0xf]
        %v1153 = vld [vmem:[%s3 + $0xa0] sm:$0xf]
        %v1154 = vld [vmem:[%s3 + $0xa4] sm:$0xf]
        %v1155 = vld [vmem:[%s3 + $0xa8] sm:$0xf]
        %v1156 = vld [vmem:[%s3 + $0xac] sm:$0xf]
        %v1157 = vld [vmem:[%s3 + $0xb0] sm:$0xf]
        %v1158 = vld [vmem:[%s3 + $0xb4] sm:$0xf]
        %v1159 = vld [vmem:[%s3 + $0xb8] sm:$0xf]
        %v1160 = vld [vmem:[%s3 + $0xbc] sm:$0xf]
        %v1161 = vld [vmem:[%s3 + $0xc0] sm:$0xf]
        %v1162 = vld [vmem:[%s3 + $0xc4] sm:$0xf]
        %v1163 = vld [vmem:[%s3 + $0xc8] sm:$0xf]
        %v1164 = vld [vmem:[%s3 + $0xcc] sm:$0xf]
        %v1165 = vld [vmem:[%s3 + $0xd0] sm:$0xf]
        %v1166 = vld [vmem:[%s3 + $0xd4] sm:$0xf]
        %v1167 = vld [vmem:[%s3 + $0xd8] sm:$0xf]
        %v1168 = vld [vmem:[%s3 + $0xdc] sm:$0xf]
        %s1169 = scalar_lea.vmem %s3, 224
        %v1170 = vld [vmem:[%s1169] sm:$0xf]
        %v1171 = vld [vmem:[%s1169 + $0x4] sm:$0xf]
        %v1172 = vld [vmem:[%s1169 + $0x8] sm:$0xf]
        %v1173 = vld [vmem:[%s1169 + $0xc] sm:$0xf]
        %v1174 = vld [vmem:[%s1169 + $0x10] sm:$0xf]
        %v1175 = vld [vmem:[%s1169 + $0x14] sm:$0xf]
        %v1176 = vld [vmem:[%s1169 + $0x18] sm:$0xf]
        %v1177 = vld [vmem:[%s1169 + $0x1c] sm:$0xf]
        %v1178 = vld [vmem:[%s1169 + $0x20] sm:$0xf]
        %v1179 = vld [vmem:[%s1169 + $0x24] sm:$0xf]
        %v1180 = vld [vmem:[%s1169 + $0x28] sm:$0xf]
        %v1181 = vld [vmem:[%s1169 + $0x2c] sm:$0xf]
        %v1182 = vld [vmem:[%s1169 + $0x30] sm:$0xf]
        %v1183 = vld [vmem:[%s1169 + $0x34] sm:$0xf]
        %v1184 = vld [vmem:[%s1169 + $0x38] sm:$0xf]
        %v1185 = vld [vmem:[%s1169 + $0x3c] sm:$0xf]
        %v1186 = vld [vmem:[%s1169 + $0x40] sm:$0xf]
        %v1187 = vld [vmem:[%s1169 + $0x44] sm:$0xf]
        %v1188 = vld [vmem:[%s1169 + $0x48] sm:$0xf]
        %v1189 = vld [vmem:[%s1169 + $0x4c] sm:$0xf]
        %v1190 = vld [vmem:[%s1169 + $0x50] sm:$0xf]
        %v1191 = vld [vmem:[%s1169 + $0x54] sm:$0xf]
        %v1192 = vld [vmem:[%s1169 + $0x58] sm:$0xf]
        %v1193 = vld [vmem:[%s1169 + $0x5c] sm:$0xf]
        %v1194 = vld [vmem:[%s1169 + $0x60] sm:$0xf]
        %v1195 = vld [vmem:[%s1169 + $0x64] sm:$0xf]
        %v1196 = vld [vmem:[%s1169 + $0x68] sm:$0xf]
        %v1197 = vld [vmem:[%s1169 + $0x6c] sm:$0xf]
        %v1198 = vld [vmem:[%s1169 + $0x70] sm:$0xf]
        %v1199 = vld [vmem:[%s1169 + $0x74] sm:$0xf]
        %v1200 = vld [vmem:[%s1169 + $0x78] sm:$0xf]
        %v1201 = vld [vmem:[%s1169 + $0x7c] sm:$0xf]
        %v1202 = vld [vmem:[%s1169 + $0x80] sm:$0xf]
        %v1203 = vld [vmem:[%s1169 + $0x84] sm:$0xf]
        %v1204 = vld [vmem:[%s1169 + $0x88] sm:$0xf]
        %v1205 = vld [vmem:[%s1169 + $0x8c] sm:$0xf]
        %v1206 = vld [vmem:[%s1169 + $0x90] sm:$0xf]
        %v1207 = vld [vmem:[%s1169 + $0x94] sm:$0xf]
        %v1208 = vld [vmem:[%s1169 + $0x98] sm:$0xf]
        %v1209 = vld [vmem:[%s1169 + $0x9c] sm:$0xf]
        %v1210 = vld [vmem:[%s1169 + $0xa0] sm:$0xf]
        %v1211 = vld [vmem:[%s1169 + $0xa4] sm:$0xf]
        %v1212 = vld [vmem:[%s1169 + $0xa8] sm:$0xf]
        %v1213 = vld [vmem:[%s1169 + $0xac] sm:$0xf]
        %v1214 = vld [vmem:[%s1169 + $0xb0] sm:$0xf]
        %v1215 = vld [vmem:[%s1169 + $0xb4] sm:$0xf]
        %v1216 = vld [vmem:[%s1169 + $0xb8] sm:$0xf]
        %v1217 = vld [vmem:[%s1169 + $0xbc] sm:$0xf]
        %v1218 = vld [vmem:[%s1169 + $0xc0] sm:$0xf]
        %v1219 = vld [vmem:[%s1169 + $0xc4] sm:$0xf]
        %v1220 = vld [vmem:[%s1169 + $0xc8] sm:$0xf]
        %v1221 = vld [vmem:[%s1169 + $0xcc] sm:$0xf]
        %v1222 = vld [vmem:[%s1169 + $0xd0] sm:$0xf]
        %v1223 = vld [vmem:[%s1169 + $0xd4] sm:$0xf]
        %v1224 = vld [vmem:[%s1169 + $0xd8] sm:$0xf]
        %v1225 = vld [vmem:[%s1169 + $0xdc] sm:$0xf]
        %v1227 = vshrl.u32 %v1109, 16
        %v1229 = vshll.u32 %v1109, 16
        %v1231 = vrot.slane %v1229, 1
        %v1232 = vor.u32 %v1227, %v1231
        %v1234 = vshrl.u32 %v1110, 16
        %v1236 = vshll.u32 %v1110, 16
        %v1238 = vrot.slane %v1236, 1
        %v1239 = vor.u32 %v1234, %v1238
        %v1241 = vshrl.u32 %v1111, 16
        %v1243 = vshll.u32 %v1111, 16
        %v1245 = vrot.slane %v1243, 1
        %v1246 = vor.u32 %v1241, %v1245
        %v1248 = vshrl.u32 %v1112, 16
        %v1250 = vshll.u32 %v1112, 16
        %v1252 = vrot.slane %v1250, 1
        %v1253 = vor.u32 %v1248, %v1252
        %v1313 = vunpack.c.l.b16 %v1170
        %v1314 = vunpack.c.l.b16 %v1171
        %v1315 = vunpack.c.l.b16 %v1172
        %v1316 = vunpack.c.l.b16 %v1173
        %v1317 = vunpack.c.l.b16 %v1174
        %v1318 = vunpack.c.l.b16 %v1175
        %v1319 = vunpack.c.l.b16 %v1176
        %v1320 = vunpack.c.l.b16 %v1177
        %v1321 = vunpack.c.l.b16 %v1178
        %v1322 = vunpack.c.l.b16 %v1179
        %v1323 = vunpack.c.l.b16 %v1180
        %v1324 = vunpack.c.l.b16 %v1181
        %v1325 = vunpack.c.l.b16 %v1182
        %v1326 = vunpack.c.l.b16 %v1183
        %v1327 = vunpack.c.l.b16 %v1184
        %v1328 = vunpack.c.l.b16 %v1185
        %v1329 = vunpack.c.l.b16 %v1186
        %v1330 = vunpack.c.l.b16 %v1187
        %v1331 = vunpack.c.l.b16 %v1188
        %v1332 = vunpack.c.l.b16 %v1189
        %v1333 = vunpack.c.l.b16 %v1190
        %v1334 = vunpack.c.l.b16 %v1191
        %v1335 = vunpack.c.l.b16 %v1192
        %v1336 = vunpack.c.l.b16 %v1193
        %v1337 = vunpack.c.l.b16 %v1194
        %v1338 = vunpack.c.l.b16 %v1195
        %v1339 = vunpack.c.l.b16 %v1196
        %v1340 = vunpack.c.l.b16 %v1197
        %v1341 = vunpack.c.l.b16 %v1198
        %v1342 = vunpack.c.l.b16 %v1199
        %v1343 = vunpack.c.l.b16 %v1200
        %v1344 = vunpack.c.l.b16 %v1201
        %v1345 = vunpack.c.l.b16 %v1202
        %v1346 = vunpack.c.l.b16 %v1203
        %v1347 = vunpack.c.l.b16 %v1204
        %v1348 = vunpack.c.l.b16 %v1205
        %v1349 = vunpack.c.l.b16 %v1206
        %v1350 = vunpack.c.l.b16 %v1207
        %v1351 = vunpack.c.l.b16 %v1208
        %v1352 = vunpack.c.l.b16 %v1209
        %v1353 = vunpack.c.l.b16 %v1210
        %v1354 = vunpack.c.l.b16 %v1211
        %v1355 = vunpack.c.l.b16 %v1212
        %v1356 = vunpack.c.l.b16 %v1213
        %v1357 = vunpack.c.l.b16 %v1214
        %v1358 = vunpack.c.l.b16 %v1215
        %v1359 = vunpack.c.l.b16 %v1216
        %v1360 = vunpack.c.l.b16 %v1217
        %v1361 = vunpack.c.l.b16 %v1218
        %v1362 = vunpack.c.l.b16 %v1219
        %v1363 = vunpack.c.l.b16 %v1220
        %v1364 = vunpack.c.l.b16 %v1221
        %v1365 = vunpack.c.l.b16 %v1222
        %v1366 = vunpack.c.l.b16 %v1223
        %v1367 = vunpack.c.l.b16 %v1224
        %v1368 = vunpack.c.l.b16 %v1225
        %v1369 = vpack.c.b16 %v1314, %v1313
        %v1370 = vpack.c.b16 %v1316, %v1315
        %v1371 = vpack.c.b16 %v1318, %v1317
        %v1372 = vpack.c.b16 %v1320, %v1319
        %v1373 = vpack.c.b16 %v1322, %v1321
        %v1374 = vpack.c.b16 %v1324, %v1323
        %v1375 = vpack.c.b16 %v1326, %v1325
        %v1376 = vpack.c.b16 %v1328, %v1327
        %v1377 = vpack.c.b16 %v1330, %v1329
        %v1378 = vpack.c.b16 %v1332, %v1331
        %v1379 = vpack.c.b16 %v1334, %v1333
        %v1380 = vpack.c.b16 %v1336, %v1335
        %v1381 = vpack.c.b16 %v1338, %v1337
        %v1382 = vpack.c.b16 %v1340, %v1339
        %v1383 = vpack.c.b16 %v1342, %v1341
        %v1384 = vpack.c.b16 %v1344, %v1343
        %v1385 = vpack.c.b16 %v1346, %v1345
        %v1386 = vpack.c.b16 %v1348, %v1347
        %v1387 = vpack.c.b16 %v1350, %v1349
        %v1388 = vpack.c.b16 %v1352, %v1351
        %v1389 = vpack.c.b16 %v1354, %v1353
        %v1390 = vpack.c.b16 %v1356, %v1355
        %v1391 = vpack.c.b16 %v1358, %v1357
        %v1392 = vpack.c.b16 %v1360, %v1359
        %v1393 = vpack.c.b16 %v1362, %v1361
        %v1394 = vpack.c.b16 %v1364, %v1363
        %v1395 = vpack.c.b16 %v1366, %v1365
        %v1396 = vpack.c.b16 %v1368, %v1367
        %vm1425 = vcmask 523264
        %v1427 = vsel %vm1425, %v1253, 0
        %1429 = vmatprep.subr.bf16.mxu0 0
        %1430 = vmatpush1.bf16.msra.mxu0 %v1376
        %1431 = vmatprep.subr.bf16.mxu0 0
        %1432 = vmatpush1.bf16.msra.mxu0 %v1375
        %1433 = vmatprep.subr.bf16.mxu0 0
        %1434 = vmatpush1.bf16.msra.mxu0 %v1374
        %1435 = vmatprep.subr.bf16.mxu0 0
        %1436 = vmatpush1.bf16.msra.mxu0 %v1373
        %1437 = vmatprep.subr.bf16.mxu0 0
        %1438 = vmatpush1.bf16.msra.mxu0 %v1372
        %1439 = vmatprep.subr.bf16.mxu0 0
        %1440 = vmatpush1.bf16.msra.mxu0 %v1371
        %1441 = vmatprep.subr.bf16.mxu0 0
        %1442 = vmatpush1.bf16.msra.mxu0 %v1370
        %1443 = vmatprep.subr.bf16.mxu0 0
        %1444 = vmatpush1.bf16.msra.mxu0 %v1369
        %1445 = vmatprep.subr.bf16.mxu0 0
        %1446 = vmatpush2.bf16.msra.mxu0 %v1384
        %1447 = vmatprep.subr.bf16.mxu0 0
        %1448 = vmatpush2.bf16.msra.mxu0 %v1383
        %1449 = vmatprep.subr.bf16.mxu0 0
        %1450 = vmatpush2.bf16.msra.mxu0 %v1382
        %1451 = vmatprep.subr.bf16.mxu0 0
        %1452 = vmatpush2.bf16.msra.mxu0 %v1381
        %1453 = vmatprep.subr.bf16.mxu0 0
        %1454 = vmatpush2.bf16.msra.mxu0 %v1380
        %1455 = vmatprep.subr.bf16.mxu0 0
        %1456 = vmatpush2.bf16.msra.mxu0 %v1379
        %1457 = vmatprep.subr.bf16.mxu0 0
        %1458 = vmatpush2.bf16.msra.mxu0 %v1378
        %1459 = vmatprep.subr.bf16.mxu0 0
        %1460 = vmatpush2.bf16.msra.mxu0 %v1377
        %1461 = vmatprep.mubr.bf16.mxu0 %v1239
        %1462 = vmatmul.mubr.bf16.gmra.mxu0 %v1232
        %v1463 = vpop.f32.mrf.mxu0
        %v1464 = vadd.f32 0.0, %v1463
        %v1465 = vpop.f32.mrf.mxu0
        %v1466 = vpop.f32.mrf.mxu0
        %v1467 = vpop.f32.mrf.mxu0
        %1468 = vdwg.mxu0
        %1469 = vmatprep.subr.bf16.mxu0 0
        %1470 = vmatpush1.bf16.msra.mxu0 %v1392
        %1471 = vmatprep.subr.bf16.mxu0 0
        %1472 = vmatpush1.bf16.msra.mxu0 %v1391
        %1473 = vmatprep.subr.bf16.mxu0 0
        %1474 = vmatpush1.bf16.msra.mxu0 %v1390
        %1475 = vmatprep.subr.bf16.mxu0 0
        %1476 = vmatpush1.bf16.msra.mxu0 %v1389
        %1477 = vmatprep.subr.bf16.mxu0 0
        %1478 = vmatpush1.bf16.msra.mxu0 %v1388
        %1479 = vmatprep.subr.bf16.mxu0 0
        %1480 = vmatpush1.bf16.msra.mxu0 %v1387
        %1481 = vmatprep.subr.bf16.mxu0 0
        %1482 = vmatpush1.bf16.msra.mxu0 %v1386
        %1483 = vmatprep.subr.bf16.mxu0 0
        %1484 = vmatpush1.bf16.msra.mxu0 %v1385
        %1485 = vmatprep.subr.bf16.mxu0 0
        %1486 = vmatpush2.bf16.msra.mxu0 0
        %1487 = vmatprep.subr.bf16.mxu0 0
        %1488 = vmatpush2.bf16.msra.mxu0 0
        %1489 = vmatprep.subr.bf16.mxu0 0
        %1490 = vmatpush2.bf16.msra.mxu0 0
        %1491 = vmatprep.subr.bf16.mxu0 0
        %1492 = vmatpush2.bf16.msra.mxu0 0
        %1493 = vmatprep.subr.bf16.mxu0 0
        %1494 = vmatpush2.bf16.msra.mxu0 %v1396
        %1495 = vmatprep.subr.bf16.mxu0 0
        %1496 = vmatpush2.bf16.msra.mxu0 %v1395
        %1497 = vmatprep.subr.bf16.mxu0 0
        %1498 = vmatpush2.bf16.msra.mxu0 %v1394
        %1499 = vmatprep.subr.bf16.mxu0 0
        %1500 = vmatpush2.bf16.msra.mxu0 %v1393
        %1501 = vmatprep.mubr.bf16.mxu0 %v1427
        %1502 = vmatmul.mubr.bf16.gmra.mxu0 %v1246
        %v1503 = vpop.f32.mrf.mxu0
        %v1504 = vadd.f32 %v1464, %v1503
        %v1505 = vpop.f32.mrf.mxu0
        %v1506 = vpop.f32.mrf.mxu0
        %v1507 = vpop.f32.mrf.mxu0
        %1508 = vdwg.mxu0
        %v1565 = vunpack.c.l.b16 %v1113
        %v1566 = vunpack.c.l.b16 %v1114
        %v1567 = vunpack.c.l.b16 %v1115
        %v1568 = vunpack.c.l.b16 %v1116
        %v1569 = vunpack.c.l.b16 %v1117
        %v1570 = vunpack.c.l.b16 %v1118
        %v1571 = vunpack.c.l.b16 %v1119
        %v1572 = vunpack.c.l.b16 %v1120
        %v1573 = vunpack.c.l.b16 %v1121
        %v1574 = vunpack.c.l.b16 %v1122
        %v1575 = vunpack.c.l.b16 %v1123
        %v1576 = vunpack.c.l.b16 %v1124
        %v1577 = vunpack.c.l.b16 %v1125
        %v1578 = vunpack.c.l.b16 %v1126
        %v1579 = vunpack.c.l.b16 %v1127
        %v1580 = vunpack.c.l.b16 %v1128
        %v1581 = vunpack.c.l.b16 %v1129
        %v1582 = vunpack.c.l.b16 %v1130
        %v1583 = vunpack.c.l.b16 %v1131
        %v1584 = vunpack.c.l.b16 %v1132
        %v1585 = vunpack.c.l.b16 %v1133
        %v1586 = vunpack.c.l.b16 %v1134
        %v1587 = vunpack.c.l.b16 %v1135
        %v1588 = vunpack.c.l.b16 %v1136
        %v1589 = vunpack.c.l.b16 %v1137
        %v1590 = vunpack.c.l.b16 %v1138
        %v1591 = vunpack.c.l.b16 %v1139
        %v1592 = vunpack.c.l.b16 %v1140
        %v1593 = vunpack.c.l.b16 %v1141
        %v1594 = vunpack.c.l.b16 %v1142
        %v1595 = vunpack.c.l.b16 %v1143
        %v1596 = vunpack.c.l.b16 %v1144
        %v1597 = vunpack.c.l.b16 %v1145
        %v1598 = vunpack.c.l.b16 %v1146
        %v1599 = vunpack.c.l.b16 %v1147
        %v1600 = vunpack.c.l.b16 %v1148
        %v1601 = vunpack.c.l.b16 %v1149
        %v1602 = vunpack.c.l.b16 %v1150
        %v1603 = vunpack.c.l.b16 %v1151
        %v1604 = vunpack.c.l.b16 %v1152
        %v1605 = vunpack.c.l.b16 %v1153
        %v1606 = vunpack.c.l.b16 %v1154
        %v1607 = vunpack.c.l.b16 %v1155
        %v1608 = vunpack.c.l.b16 %v1156
        %v1609 = vunpack.c.l.b16 %v1157
        %v1610 = vunpack.c.l.b16 %v1158
        %v1611 = vunpack.c.l.b16 %v1159
        %v1612 = vunpack.c.l.b16 %v1160
        %v1613 = vunpack.c.l.b16 %v1161
        %v1614 = vunpack.c.l.b16 %v1162
        %v1615 = vunpack.c.l.b16 %v1163
        %v1616 = vunpack.c.l.b16 %v1164
        %v1617 = vunpack.c.l.b16 %v1165
        %v1618 = vunpack.c.l.b16 %v1166
        %v1619 = vunpack.c.l.b16 %v1167
        %v1620 = vunpack.c.l.b16 %v1168
        %v1621 = vpack.c.b16 %v1566, %v1565
        %v1622 = vpack.c.b16 %v1568, %v1567
        %v1623 = vpack.c.b16 %v1570, %v1569
        %v1624 = vpack.c.b16 %v1572, %v1571
        %v1625 = vpack.c.b16 %v1574, %v1573
        %v1626 = vpack.c.b16 %v1576, %v1575
        %v1627 = vpack.c.b16 %v1578, %v1577
        %v1628 = vpack.c.b16 %v1580, %v1579
        %v1629 = vpack.c.b16 %v1582, %v1581
        %v1630 = vpack.c.b16 %v1584, %v1583
        %v1631 = vpack.c.b16 %v1586, %v1585
        %v1632 = vpack.c.b16 %v1588, %v1587
        %v1633 = vpack.c.b16 %v1590, %v1589
        %v1634 = vpack.c.b16 %v1592, %v1591
        %v1635 = vpack.c.b16 %v1594, %v1593
        %v1636 = vpack.c.b16 %v1596, %v1595
        %v1637 = vpack.c.b16 %v1598, %v1597
        %v1638 = vpack.c.b16 %v1600, %v1599
        %v1639 = vpack.c.b16 %v1602, %v1601
        %v1640 = vpack.c.b16 %v1604, %v1603
        %v1641 = vpack.c.b16 %v1606, %v1605
        %v1642 = vpack.c.b16 %v1608, %v1607
        %v1643 = vpack.c.b16 %v1610, %v1609
        %v1644 = vpack.c.b16 %v1612, %v1611
        %v1645 = vpack.c.b16 %v1614, %v1613
        %v1646 = vpack.c.b16 %v1616, %v1615
        %v1647 = vpack.c.b16 %v1618, %v1617
        %v1648 = vpack.c.b16 %v1620, %v1619
        %v1677 = vsel %vm1425, %v1112, 0
        %1679 = vmatprep.subr.bf16.mxu0 0
        %1680 = vmatpush1.bf16.msra.mxu0 %v1628
        %1681 = vmatprep.subr.bf16.mxu0 0
        %1682 = vmatpush1.bf16.msra.mxu0 %v1627
        %1683 = vmatprep.subr.bf16.mxu0 0
        %1684 = vmatpush1.bf16.msra.mxu0 %v1626
        %1685 = vmatprep.subr.bf16.mxu0 0
        %1686 = vmatpush1.bf16.msra.mxu0 %v1625
        %1687 = vmatprep.subr.bf16.mxu0 0
        %1688 = vmatpush1.bf16.msra.mxu0 %v1624
        %1689 = vmatprep.subr.bf16.mxu0 0
        %1690 = vmatpush1.bf16.msra.mxu0 %v1623
        %1691 = vmatprep.subr.bf16.mxu0 0
        %1692 = vmatpush1.bf16.msra.mxu0 %v1622
        %1693 = vmatprep.subr.bf16.mxu0 0
        %1694 = vmatpush1.bf16.msra.mxu0 %v1621
        %1695 = vmatprep.subr.bf16.mxu0 0
        %1696 = vmatpush2.bf16.msra.mxu0 %v1636
        %1697 = vmatprep.subr.bf16.mxu0 0
        %1698 = vmatpush2.bf16.msra.mxu0 %v1635
        %1699 = vmatprep.subr.bf16.mxu0 0
        %1700 = vmatpush2.bf16.msra.mxu0 %v1634
        %1701 = vmatprep.subr.bf16.mxu0 0
        %1702 = vmatpush2.bf16.msra.mxu0 %v1633
        %1703 = vmatprep.subr.bf16.mxu0 0
        %1704 = vmatpush2.bf16.msra.mxu0 %v1632
        %1705 = vmatprep.subr.bf16.mxu0 0
        %1706 = vmatpush2.bf16.msra.mxu0 %v1631
        %1707 = vmatprep.subr.bf16.mxu0 0
        %1708 = vmatpush2.bf16.msra.mxu0 %v1630
        %1709 = vmatprep.subr.bf16.mxu0 0
        %1710 = vmatpush2.bf16.msra.mxu0 %v1629
        %1711 = vmatprep.mubr.bf16.mxu0 %v1110
        %1712 = vmatmul.mubr.bf16.gmra.mxu0 %v1109
        %v1713 = vpop.f32.mrf.mxu0
        %v1714 = vadd.f32 %v1504, %v1713
        %v1715 = vpop.f32.mrf.mxu0
        %v1716 = vpop.f32.mrf.mxu0
        %v1717 = vpop.f32.mrf.mxu0
        %1718 = vdwg.mxu0
        %1719 = vmatprep.subr.bf16.mxu0 0
        %1720 = vmatpush1.bf16.msra.mxu0 %v1644
        %1721 = vmatprep.subr.bf16.mxu0 0
        %1722 = vmatpush1.bf16.msra.mxu0 %v1643
        %1723 = vmatprep.subr.bf16.mxu0 0
        %1724 = vmatpush1.bf16.msra.mxu0 %v1642
        %1725 = vmatprep.subr.bf16.mxu0 0
        %1726 = vmatpush1.bf16.msra.mxu0 %v1641
        %1727 = vmatprep.subr.bf16.mxu0 0
        %1728 = vmatpush1.bf16.msra.mxu0 %v1640
        %1729 = vmatprep.subr.bf16.mxu0 0
        %1730 = vmatpush1.bf16.msra.mxu0 %v1639
        %1731 = vmatprep.subr.bf16.mxu0 0
        %1732 = vmatpush1.bf16.msra.mxu0 %v1638
        %1733 = vmatprep.subr.bf16.mxu0 0
        %1734 = vmatpush1.bf16.msra.mxu0 %v1637
        %1735 = vmatprep.subr.bf16.mxu0 0
        %1736 = vmatpush2.bf16.msra.mxu0 0
        %1737 = vmatprep.subr.bf16.mxu0 0
        %1738 = vmatpush2.bf16.msra.mxu0 0
        %1739 = vmatprep.subr.bf16.mxu0 0
        %1740 = vmatpush2.bf16.msra.mxu0 0
        %1741 = vmatprep.subr.bf16.mxu0 0
        %1742 = vmatpush2.bf16.msra.mxu0 0
        %1743 = vmatprep.subr.bf16.mxu0 0
        %1744 = vmatpush2.bf16.msra.mxu0 %v1648
        %1745 = vmatprep.subr.bf16.mxu0 0
        %1746 = vmatpush2.bf16.msra.mxu0 %v1647
        %1747 = vmatprep.subr.bf16.mxu0 0
        %1748 = vmatpush2.bf16.msra.mxu0 %v1646
        %1749 = vmatprep.subr.bf16.mxu0 0
        %1750 = vmatpush2.bf16.msra.mxu0 %v1645
        %1751 = vmatprep.mubr.bf16.mxu0 %v1677
        %1752 = vmatmul.mubr.bf16.gmra.mxu0 %v1111
        %v1753 = vpop.f32.mrf.mxu0
        %v1754 = vadd.f32 %v1714, %v1753
        %v1755 = vpop.f32.mrf.mxu0
        %v1756 = vpop.f32.mrf.mxu0
        %v1757 = vpop.f32.mrf.mxu0
        %1758 = vdwg.mxu0
        %s1759 = scalar_lea.vmem %s3, 448
        %v1760 = vld [vmem:[%s1759] sm:$0xf]
        %v1761 = vld [vmem:[%s1759 + $0x4] sm:$0xf]
        %v1762 = vld [vmem:[%s1759 + $0x8] sm:$0xf]
        %v1763 = vld [vmem:[%s1759 + $0xc] sm:$0xf]
        %v1764 = vld [vmem:[%s1759 + $0x10] sm:$0xf]
        %v1765 = vld [vmem:[%s1759 + $0x14] sm:$0xf]
        %v1766 = vld [vmem:[%s1759 + $0x18] sm:$0xf]
        %v1767 = vld [vmem:[%s1759 + $0x1c] sm:$0xf]
        %v1768 = vld [vmem:[%s1759 + $0x20] sm:$0xf]
        %v1769 = vld [vmem:[%s1759 + $0x24] sm:$0xf]
        %v1770 = vld [vmem:[%s1759 + $0x28] sm:$0xf]
        %v1771 = vld [vmem:[%s1759 + $0x2c] sm:$0xf]
        %v1772 = vld [vmem:[%s1759 + $0x30] sm:$0xf]
        %v1773 = vld [vmem:[%s1759 + $0x34] sm:$0xf]
        %v1774 = vld [vmem:[%s1759 + $0x38] sm:$0xf]
        %v1775 = vld [vmem:[%s1759 + $0x3c] sm:$0xf]
        %v1776 = vld [vmem:[%s1759 + $0x40] sm:$0xf]
        %v1777 = vld [vmem:[%s1759 + $0x44] sm:$0xf]
        %v1778 = vld [vmem:[%s1759 + $0x48] sm:$0xf]
        %v1779 = vld [vmem:[%s1759 + $0x4c] sm:$0xf]
        %v1780 = vld [vmem:[%s1759 + $0x50] sm:$0xf]
        %v1781 = vld [vmem:[%s1759 + $0x54] sm:$0xf]
        %v1782 = vld [vmem:[%s1759 + $0x58] sm:$0xf]
        %v1783 = vld [vmem:[%s1759 + $0x5c] sm:$0xf]
        %v1784 = vld [vmem:[%s1759 + $0x60] sm:$0xf]
        %v1785 = vld [vmem:[%s1759 + $0x64] sm:$0xf]
        %v1786 = vld [vmem:[%s1759 + $0x68] sm:$0xf]
        %v1787 = vld [vmem:[%s1759 + $0x6c] sm:$0xf]
        %v1788 = vld [vmem:[%s1759 + $0x70] sm:$0xf]
        %v1789 = vld [vmem:[%s1759 + $0x74] sm:$0xf]
        %v1790 = vld [vmem:[%s1759 + $0x78] sm:$0xf]
        %v1791 = vld [vmem:[%s1759 + $0x7c] sm:$0xf]
        %v1792 = vld [vmem:[%s1759 + $0x80] sm:$0xf]
        %v1793 = vld [vmem:[%s1759 + $0x84] sm:$0xf]
        %v1794 = vld [vmem:[%s1759 + $0x88] sm:$0xf]
        %v1795 = vld [vmem:[%s1759 + $0x8c] sm:$0xf]
        %v1796 = vld [vmem:[%s1759 + $0x90] sm:$0xf]
        %v1797 = vld [vmem:[%s1759 + $0x94] sm:$0xf]
        %v1798 = vld [vmem:[%s1759 + $0x98] sm:$0xf]
        %v1799 = vld [vmem:[%s1759 + $0x9c] sm:$0xf]
        %v1800 = vld [vmem:[%s1759 + $0xa0] sm:$0xf]
        %v1801 = vld [vmem:[%s1759 + $0xa4] sm:$0xf]
        %v1802 = vld [vmem:[%s1759 + $0xa8] sm:$0xf]
        %v1803 = vld [vmem:[%s1759 + $0xac] sm:$0xf]
        %v1804 = vld [vmem:[%s1759 + $0xb0] sm:$0xf]
        %v1805 = vld [vmem:[%s1759 + $0xb4] sm:$0xf]
        %v1806 = vld [vmem:[%s1759 + $0xb8] sm:$0xf]
        %v1807 = vld [vmem:[%s1759 + $0xbc] sm:$0xf]
        %v1808 = vld [vmem:[%s1759 + $0xc0] sm:$0xf]
        %v1809 = vld [vmem:[%s1759 + $0xc4] sm:$0xf]
        %v1810 = vld [vmem:[%s1759 + $0xc8] sm:$0xf]
        %v1811 = vld [vmem:[%s1759 + $0xcc] sm:$0xf]
        %v1812 = vld [vmem:[%s1759 + $0xd0] sm:$0xf]
        %v1813 = vld [vmem:[%s1759 + $0xd4] sm:$0xf]
        %v1814 = vld [vmem:[%s1759 + $0xd8] sm:$0xf]
        %v1815 = vld [vmem:[%s1759 + $0xdc] sm:$0xf]
        %v1820 = vrot.slane %v1109, 1
        %v1821 = vrot.slane %v1110, 1
        %v1822 = vrot.slane %v1111, 1
        %v1823 = vrot.slane %v1112, 1
        %v1883 = vunpack.c.l.b16 %v1760
        %v1884 = vunpack.c.l.b16 %v1761
        %v1885 = vunpack.c.l.b16 %v1762
        %v1886 = vunpack.c.l.b16 %v1763
        %v1887 = vunpack.c.l.b16 %v1764
        %v1888 = vunpack.c.l.b16 %v1765
        %v1889 = vunpack.c.l.b16 %v1766
        %v1890 = vunpack.c.l.b16 %v1767
        %v1891 = vunpack.c.l.b16 %v1768
        %v1892 = vunpack.c.l.b16 %v1769
        %v1893 = vunpack.c.l.b16 %v1770
        %v1894 = vunpack.c.l.b16 %v1771
        %v1895 = vunpack.c.l.b16 %v1772
        %v1896 = vunpack.c.l.b16 %v1773
        %v1897 = vunpack.c.l.b16 %v1774
        %v1898 = vunpack.c.l.b16 %v1775
        %v1899 = vunpack.c.l.b16 %v1776
        %v1900 = vunpack.c.l.b16 %v1777
        %v1901 = vunpack.c.l.b16 %v1778
        %v1902 = vunpack.c.l.b16 %v1779
        %v1903 = vunpack.c.l.b16 %v1780
        %v1904 = vunpack.c.l.b16 %v1781
        %v1905 = vunpack.c.l.b16 %v1782
        %v1906 = vunpack.c.l.b16 %v1783
        %v1907 = vunpack.c.l.b16 %v1784
        %v1908 = vunpack.c.l.b16 %v1785
        %v1909 = vunpack.c.l.b16 %v1786
        %v1910 = vunpack.c.l.b16 %v1787
        %v1911 = vunpack.c.l.b16 %v1788
        %v1912 = vunpack.c.l.b16 %v1789
        %v1913 = vunpack.c.l.b16 %v1790
        %v1914 = vunpack.c.l.b16 %v1791
        %v1915 = vunpack.c.l.b16 %v1792
        %v1916 = vunpack.c.l.b16 %v1793
        %v1917 = vunpack.c.l.b16 %v1794
        %v1918 = vunpack.c.l.b16 %v1795
        %v1919 = vunpack.c.l.b16 %v1796
        %v1920 = vunpack.c.l.b16 %v1797
        %v1921 = vunpack.c.l.b16 %v1798
        %v1922 = vunpack.c.l.b16 %v1799
        %v1923 = vunpack.c.l.b16 %v1800
        %v1924 = vunpack.c.l.b16 %v1801
        %v1925 = vunpack.c.l.b16 %v1802
        %v1926 = vunpack.c.l.b16 %v1803
        %v1927 = vunpack.c.l.b16 %v1804
        %v1928 = vunpack.c.l.b16 %v1805
        %v1929 = vunpack.c.l.b16 %v1806
        %v1930 = vunpack.c.l.b16 %v1807
        %v1931 = vunpack.c.l.b16 %v1808
        %v1932 = vunpack.c.l.b16 %v1809
        %v1933 = vunpack.c.l.b16 %v1810
        %v1934 = vunpack.c.l.b16 %v1811
        %v1935 = vunpack.c.l.b16 %v1812
        %v1936 = vunpack.c.l.b16 %v1813
        %v1937 = vunpack.c.l.b16 %v1814
        %v1938 = vunpack.c.l.b16 %v1815
        %v1939 = vpack.c.b16 %v1884, %v1883
        %v1940 = vpack.c.b16 %v1886, %v1885
        %v1941 = vpack.c.b16 %v1888, %v1887
        %v1942 = vpack.c.b16 %v1890, %v1889
        %v1943 = vpack.c.b16 %v1892, %v1891
        %v1944 = vpack.c.b16 %v1894, %v1893
        %v1945 = vpack.c.b16 %v1896, %v1895
        %v1946 = vpack.c.b16 %v1898, %v1897
        %v1947 = vpack.c.b16 %v1900, %v1899
        %v1948 = vpack.c.b16 %v1902, %v1901
        %v1949 = vpack.c.b16 %v1904, %v1903
        %v1950 = vpack.c.b16 %v1906, %v1905
        %v1951 = vpack.c.b16 %v1908, %v1907
        %v1952 = vpack.c.b16 %v1910, %v1909
        %v1953 = vpack.c.b16 %v1912, %v1911
        %v1954 = vpack.c.b16 %v1914, %v1913
        %v1955 = vpack.c.b16 %v1916, %v1915
        %v1956 = vpack.c.b16 %v1918, %v1917
        %v1957 = vpack.c.b16 %v1920, %v1919
        %v1958 = vpack.c.b16 %v1922, %v1921
        %v1959 = vpack.c.b16 %v1924, %v1923
        %v1960 = vpack.c.b16 %v1926, %v1925
        %v1961 = vpack.c.b16 %v1928, %v1927
        %v1962 = vpack.c.b16 %v1930, %v1929
        %v1963 = vpack.c.b16 %v1932, %v1931
        %v1964 = vpack.c.b16 %v1934, %v1933
        %v1965 = vpack.c.b16 %v1936, %v1935
        %v1966 = vpack.c.b16 %v1938, %v1937
        %v1996 = vsel %vm1425, %v1823, 0
        %1998 = vmatprep.subr.bf16.mxu0 0
        %1999 = vmatpush1.bf16.msra.mxu0 %v1946
        %2000 = vmatprep.subr.bf16.mxu0 0
        %2001 = vmatpush1.bf16.msra.mxu0 %v1945
        %2002 = vmatprep.subr.bf16.mxu0 0
        %2003 = vmatpush1.bf16.msra.mxu0 %v1944
        %2004 = vmatprep.subr.bf16.mxu0 0
        %2005 = vmatpush1.bf16.msra.mxu0 %v1943
        %2006 = vmatprep.subr.bf16.mxu0 0
        %2007 = vmatpush1.bf16.msra.mxu0 %v1942
        %2008 = vmatprep.subr.bf16.mxu0 0
        %2009 = vmatpush1.bf16.msra.mxu0 %v1941
        %2010 = vmatprep.subr.bf16.mxu0 0
        %2011 = vmatpush1.bf16.msra.mxu0 %v1940
        %2012 = vmatprep.subr.bf16.mxu0 0
        %2013 = vmatpush1.bf16.msra.mxu0 %v1939
        %2014 = vmatprep.subr.bf16.mxu0 0
        %2015 = vmatpush2.bf16.msra.mxu0 %v1954
        %2016 = vmatprep.subr.bf16.mxu0 0
        %2017 = vmatpush2.bf16.msra.mxu0 %v1953
        %2018 = vmatprep.subr.bf16.mxu0 0
        %2019 = vmatpush2.bf16.msra.mxu0 %v1952
        %2020 = vmatprep.subr.bf16.mxu0 0
        %2021 = vmatpush2.bf16.msra.mxu0 %v1951
        %2022 = vmatprep.subr.bf16.mxu0 0
        %2023 = vmatpush2.bf16.msra.mxu0 %v1950
        %2024 = vmatprep.subr.bf16.mxu0 0
        %2025 = vmatpush2.bf16.msra.mxu0 %v1949
        %2026 = vmatprep.subr.bf16.mxu0 0
        %2027 = vmatpush2.bf16.msra.mxu0 %v1948
        %2028 = vmatprep.subr.bf16.mxu0 0
        %2029 = vmatpush2.bf16.msra.mxu0 %v1947
        %2030 = vmatprep.mubr.bf16.mxu0 %v1821
        %2031 = vmatmul.mubr.bf16.gmra.mxu0 %v1820
        %v2032 = vpop.f32.mrf.mxu0
        %v2033 = vadd.f32 0.0, %v2032
        %v2034 = vpop.f32.mrf.mxu0
        %v2035 = vpop.f32.mrf.mxu0
        %v2036 = vpop.f32.mrf.mxu0
        %2037 = vdwg.mxu0
        %2038 = vmatprep.subr.bf16.mxu0 0
        %2039 = vmatpush1.bf16.msra.mxu0 %v1962
        %2040 = vmatprep.subr.bf16.mxu0 0
        %2041 = vmatpush1.bf16.msra.mxu0 %v1961
        %2042 = vmatprep.subr.bf16.mxu0 0
        %2043 = vmatpush1.bf16.msra.mxu0 %v1960
        %2044 = vmatprep.subr.bf16.mxu0 0
        %2045 = vmatpush1.bf16.msra.mxu0 %v1959
        %2046 = vmatprep.subr.bf16.mxu0 0
        %2047 = vmatpush1.bf16.msra.mxu0 %v1958
        %2048 = vmatprep.subr.bf16.mxu0 0
        %2049 = vmatpush1.bf16.msra.mxu0 %v1957
        %2050 = vmatprep.subr.bf16.mxu0 0
        %2051 = vmatpush1.bf16.msra.mxu0 %v1956
        %2052 = vmatprep.subr.bf16.mxu0 0
        %2053 = vmatpush1.bf16.msra.mxu0 %v1955
        %2054 = vmatprep.subr.bf16.mxu0 0
        %2055 = vmatpush2.bf16.msra.mxu0 0
        %2056 = vmatprep.subr.bf16.mxu0 0
        %2057 = vmatpush2.bf16.msra.mxu0 0
        %2058 = vmatprep.subr.bf16.mxu0 0
        %2059 = vmatpush2.bf16.msra.mxu0 0
        %2060 = vmatprep.subr.bf16.mxu0 0
        %2061 = vmatpush2.bf16.msra.mxu0 0
        %2062 = vmatprep.subr.bf16.mxu0 0
        %2063 = vmatpush2.bf16.msra.mxu0 %v1966
        %2064 = vmatprep.subr.bf16.mxu0 0
        %2065 = vmatpush2.bf16.msra.mxu0 %v1965
        %2066 = vmatprep.subr.bf16.mxu0 0
        %2067 = vmatpush2.bf16.msra.mxu0 %v1964
        %2068 = vmatprep.subr.bf16.mxu0 0
        %2069 = vmatpush2.bf16.msra.mxu0 %v1963
        %2070 = vmatprep.mubr.bf16.mxu0 %v1996
        %2071 = vmatmul.mubr.bf16.gmra.mxu0 %v1822
        %v2072 = vpop.f32.mrf.mxu0
        %v2073 = vadd.f32 %v2033, %v2072
        %v2074 = vpop.f32.mrf.mxu0
        %v2075 = vpop.f32.mrf.mxu0
        %v2076 = vpop.f32.mrf.mxu0
        %2077 = vdwg.mxu0
        %v2078 = vadd.f32 %v1754, %v2073
        %s2079 = scalar_lea.vmem %s3, 672
        %v2080 = vld [vmem:[%s2079] sm:$0xf]
        %v2081 = vld [vmem:[%s2079 + $0x4] sm:$0xf]
        %v2082 = vld [vmem:[%s2079 + $0x8] sm:$0xf]
        %v2083 = vld [vmem:[%s2079 + $0xc] sm:$0xf]
        %v2084 = vld [vmem:[%s2079 + $0x10] sm:$0xf]
        %v2085 = vld [vmem:[%s2079 + $0x14] sm:$0xf]
        %v2086 = vld [vmem:[%s2079 + $0x18] sm:$0xf]
        %v2087 = vld [vmem:[%s2079 + $0x1c] sm:$0xf]
        %v2088 = vld [vmem:[%s2079 + $0x20] sm:$0xf]
        %v2089 = vld [vmem:[%s2079 + $0x24] sm:$0xf]
        %v2090 = vld [vmem:[%s2079 + $0x28] sm:$0xf]
        %v2091 = vld [vmem:[%s2079 + $0x2c] sm:$0xf]
        %v2092 = vld [vmem:[%s2079 + $0x30] sm:$0xf]
        %v2093 = vld [vmem:[%s2079 + $0x34] sm:$0xf]
        %v2094 = vld [vmem:[%s2079 + $0x38] sm:$0xf]
        %v2095 = vld [vmem:[%s2079 + $0x3c] sm:$0xf]
        %v2096 = vld [vmem:[%s2079 + $0x40] sm:$0xf]
        %v2097 = vld [vmem:[%s2079 + $0x44] sm:$0xf]
        %v2098 = vld [vmem:[%s2079 + $0x48] sm:$0xf]
        %v2099 = vld [vmem:[%s2079 + $0x4c] sm:$0xf]
        %v2100 = vld [vmem:[%s2079 + $0x50] sm:$0xf]
        %v2101 = vld [vmem:[%s2079 + $0x54] sm:$0xf]
        %v2102 = vld [vmem:[%s2079 + $0x58] sm:$0xf]
        %v2103 = vld [vmem:[%s2079 + $0x5c] sm:$0xf]
        %v2104 = vld [vmem:[%s2079 + $0x60] sm:$0xf]
        %v2105 = vld [vmem:[%s2079 + $0x64] sm:$0xf]
        %v2106 = vld [vmem:[%s2079 + $0x68] sm:$0xf]
        %v2107 = vld [vmem:[%s2079 + $0x6c] sm:$0xf]
        %v2108 = vld [vmem:[%s2079 + $0x70] sm:$0xf]
        %v2109 = vld [vmem:[%s2079 + $0x74] sm:$0xf]
        %v2110 = vld [vmem:[%s2079 + $0x78] sm:$0xf]
        %v2111 = vld [vmem:[%s2079 + $0x7c] sm:$0xf]
        %v2112 = vld [vmem:[%s2079 + $0x80] sm:$0xf]
        %v2113 = vld [vmem:[%s2079 + $0x84] sm:$0xf]
        %v2114 = vld [vmem:[%s2079 + $0x88] sm:$0xf]
        %v2115 = vld [vmem:[%s2079 + $0x8c] sm:$0xf]
        %v2116 = vld [vmem:[%s2079 + $0x90] sm:$0xf]
        %v2117 = vld [vmem:[%s2079 + $0x94] sm:$0xf]
        %v2118 = vld [vmem:[%s2079 + $0x98] sm:$0xf]
        %v2119 = vld [vmem:[%s2079 + $0x9c] sm:$0xf]
        %v2120 = vld [vmem:[%s2079 + $0xa0] sm:$0xf]
        %v2121 = vld [vmem:[%s2079 + $0xa4] sm:$0xf]
        %v2122 = vld [vmem:[%s2079 + $0xa8] sm:$0xf]
        %v2123 = vld [vmem:[%s2079 + $0xac] sm:$0xf]
        %v2124 = vld [vmem:[%s2079 + $0xb0] sm:$0xf]
        %v2125 = vld [vmem:[%s2079 + $0xb4] sm:$0xf]
        %v2126 = vld [vmem:[%s2079 + $0xb8] sm:$0xf]
        %v2127 = vld [vmem:[%s2079 + $0xbc] sm:$0xf]
        %v2128 = vld [vmem:[%s2079 + $0xc0] sm:$0xf]
        %v2129 = vld [vmem:[%s2079 + $0xc4] sm:$0xf]
        %v2130 = vld [vmem:[%s2079 + $0xc8] sm:$0xf]
        %v2131 = vld [vmem:[%s2079 + $0xcc] sm:$0xf]
        %v2132 = vld [vmem:[%s2079 + $0xd0] sm:$0xf]
        %v2133 = vld [vmem:[%s2079 + $0xd4] sm:$0xf]
        %v2134 = vld [vmem:[%s2079 + $0xd8] sm:$0xf]
        %v2135 = vld [vmem:[%s2079 + $0xdc] sm:$0xf]
        %v2136 = vrot.slane %v1227, 1
        %v2137 = vrot.slane %v1229, 2
        %v2138 = vor.u32 %v2136, %v2137
        %v2139 = vrot.slane %v1234, 1
        %v2140 = vrot.slane %v1236, 2
        %v2141 = vor.u32 %v2139, %v2140
        %v2142 = vrot.slane %v1241, 1
        %v2143 = vrot.slane %v1243, 2
        %v2144 = vor.u32 %v2142, %v2143
        %v2145 = vrot.slane %v1248, 1
        %v2146 = vrot.slane %v1250, 2
        %v2147 = vor.u32 %v2145, %v2146
        %v2207 = vunpack.c.l.b16 %v2080
        %v2208 = vunpack.c.l.b16 %v2081
        %v2209 = vunpack.c.l.b16 %v2082
        %v2210 = vunpack.c.l.b16 %v2083
        %v2211 = vunpack.c.l.b16 %v2084
        %v2212 = vunpack.c.l.b16 %v2085
        %v2213 = vunpack.c.l.b16 %v2086
        %v2214 = vunpack.c.l.b16 %v2087
        %v2215 = vunpack.c.l.b16 %v2088
        %v2216 = vunpack.c.l.b16 %v2089
        %v2217 = vunpack.c.l.b16 %v2090
        %v2218 = vunpack.c.l.b16 %v2091
        %v2219 = vunpack.c.l.b16 %v2092
        %v2220 = vunpack.c.l.b16 %v2093
        %v2221 = vunpack.c.l.b16 %v2094
        %v2222 = vunpack.c.l.b16 %v2095
        %v2223 = vunpack.c.l.b16 %v2096
        %v2224 = vunpack.c.l.b16 %v2097
        %v2225 = vunpack.c.l.b16 %v2098
        %v2226 = vunpack.c.l.b16 %v2099
        %v2227 = vunpack.c.l.b16 %v2100
        %v2228 = vunpack.c.l.b16 %v2101
        %v2229 = vunpack.c.l.b16 %v2102
        %v2230 = vunpack.c.l.b16 %v2103
        %v2231 = vunpack.c.l.b16 %v2104
        %v2232 = vunpack.c.l.b16 %v2105
        %v2233 = vunpack.c.l.b16 %v2106
        %v2234 = vunpack.c.l.b16 %v2107
        %v2235 = vunpack.c.l.b16 %v2108
        %v2236 = vunpack.c.l.b16 %v2109
        %v2237 = vunpack.c.l.b16 %v2110
        %v2238 = vunpack.c.l.b16 %v2111
        %v2239 = vunpack.c.l.b16 %v2112
        %v2240 = vunpack.c.l.b16 %v2113
        %v2241 = vunpack.c.l.b16 %v2114
        %v2242 = vunpack.c.l.b16 %v2115
        %v2243 = vunpack.c.l.b16 %v2116
        %v2244 = vunpack.c.l.b16 %v2117
        %v2245 = vunpack.c.l.b16 %v2118
        %v2246 = vunpack.c.l.b16 %v2119
        %v2247 = vunpack.c.l.b16 %v2120
        %v2248 = vunpack.c.l.b16 %v2121
        %v2249 = vunpack.c.l.b16 %v2122
        %v2250 = vunpack.c.l.b16 %v2123
        %v2251 = vunpack.c.l.b16 %v2124
        %v2252 = vunpack.c.l.b16 %v2125
        %v2253 = vunpack.c.l.b16 %v2126
        %v2254 = vunpack.c.l.b16 %v2127
        %v2255 = vunpack.c.l.b16 %v2128
        %v2256 = vunpack.c.l.b16 %v2129
        %v2257 = vunpack.c.l.b16 %v2130
        %v2258 = vunpack.c.l.b16 %v2131
        %v2259 = vunpack.c.l.b16 %v2132
        %v2260 = vunpack.c.l.b16 %v2133
        %v2261 = vunpack.c.l.b16 %v2134
        %v2262 = vunpack.c.l.b16 %v2135
        %v2263 = vpack.c.b16 %v2208, %v2207
        %v2264 = vpack.c.b16 %v2210, %v2209
        %v2265 = vpack.c.b16 %v2212, %v2211
        %v2266 = vpack.c.b16 %v2214, %v2213
        %v2267 = vpack.c.b16 %v2216, %v2215
        %v2268 = vpack.c.b16 %v2218, %v2217
        %v2269 = vpack.c.b16 %v2220, %v2219
        %v2270 = vpack.c.b16 %v2222, %v2221
        %v2271 = vpack.c.b16 %v2224, %v2223
        %v2272 = vpack.c.b16 %v2226, %v2225
        %v2273 = vpack.c.b16 %v2228, %v2227
        %v2274 = vpack.c.b16 %v2230, %v2229
        %v2275 = vpack.c.b16 %v2232, %v2231
        %v2276 = vpack.c.b16 %v2234, %v2233
        %v2277 = vpack.c.b16 %v2236, %v2235
        %v2278 = vpack.c.b16 %v2238, %v2237
        %v2279 = vpack.c.b16 %v2240, %v2239
        %v2280 = vpack.c.b16 %v2242, %v2241
        %v2281 = vpack.c.b16 %v2244, %v2243
        %v2282 = vpack.c.b16 %v2246, %v2245
        %v2283 = vpack.c.b16 %v2248, %v2247
        %v2284 = vpack.c.b16 %v2250, %v2249
        %v2285 = vpack.c.b16 %v2252, %v2251
        %v2286 = vpack.c.b16 %v2254, %v2253
        %v2287 = vpack.c.b16 %v2256, %v2255
        %v2288 = vpack.c.b16 %v2258, %v2257
        %v2289 = vpack.c.b16 %v2260, %v2259
        %v2290 = vpack.c.b16 %v2262, %v2261
        %v2320 = vsel %vm1425, %v2147, 0
        %2322 = vmatprep.subr.bf16.mxu0 0
        %2323 = vmatpush1.bf16.msra.mxu0 %v2270
        %2324 = vmatprep.subr.bf16.mxu0 0
        %2325 = vmatpush1.bf16.msra.mxu0 %v2269
        %2326 = vmatprep.subr.bf16.mxu0 0
        %2327 = vmatpush1.bf16.msra.mxu0 %v2268
        %2328 = vmatprep.subr.bf16.mxu0 0
        %2329 = vmatpush1.bf16.msra.mxu0 %v2267
        %2330 = vmatprep.subr.bf16.mxu0 0
        %2331 = vmatpush1.bf16.msra.mxu0 %v2266
        %2332 = vmatprep.subr.bf16.mxu0 0
        %2333 = vmatpush1.bf16.msra.mxu0 %v2265
        %2334 = vmatprep.subr.bf16.mxu0 0
        %2335 = vmatpush1.bf16.msra.mxu0 %v2264
        %2336 = vmatprep.subr.bf16.mxu0 0
        %2337 = vmatpush1.bf16.msra.mxu0 %v2263
        %2338 = vmatprep.subr.bf16.mxu0 0
        %2339 = vmatpush2.bf16.msra.mxu0 %v2278
        %2340 = vmatprep.subr.bf16.mxu0 0
        %2341 = vmatpush2.bf16.msra.mxu0 %v2277
        %2342 = vmatprep.subr.bf16.mxu0 0
        %2343 = vmatpush2.bf16.msra.mxu0 %v2276
        %2344 = vmatprep.subr.bf16.mxu0 0
        %2345 = vmatpush2.bf16.msra.mxu0 %v2275
        %2346 = vmatprep.subr.bf16.mxu0 0
        %2347 = vmatpush2.bf16.msra.mxu0 %v2274
        %2348 = vmatprep.subr.bf16.mxu0 0
        %2349 = vmatpush2.bf16.msra.mxu0 %v2273
        %2350 = vmatprep.subr.bf16.mxu0 0
        %2351 = vmatpush2.bf16.msra.mxu0 %v2272
        %2352 = vmatprep.subr.bf16.mxu0 0
        %2353 = vmatpush2.bf16.msra.mxu0 %v2271
        %2354 = vmatprep.mubr.bf16.mxu0 %v2141
        %2355 = vmatmul.mubr.bf16.gmra.mxu0 %v2138
        %v2356 = vpop.f32.mrf.mxu0
        %v2357 = vadd.f32 0.0, %v2356
        %v2358 = vpop.f32.mrf.mxu0
        %v2359 = vpop.f32.mrf.mxu0
        %v2360 = vpop.f32.mrf.mxu0
        %2361 = vdwg.mxu0
        %2362 = vmatprep.subr.bf16.mxu0 0
        %2363 = vmatpush1.bf16.msra.mxu0 %v2286
        %2364 = vmatprep.subr.bf16.mxu0 0
        %2365 = vmatpush1.bf16.msra.mxu0 %v2285
        %2366 = vmatprep.subr.bf16.mxu0 0
        %2367 = vmatpush1.bf16.msra.mxu0 %v2284
        %2368 = vmatprep.subr.bf16.mxu0 0
        %2369 = vmatpush1.bf16.msra.mxu0 %v2283
        %2370 = vmatprep.subr.bf16.mxu0 0
        %2371 = vmatpush1.bf16.msra.mxu0 %v2282
        %2372 = vmatprep.subr.bf16.mxu0 0
        %2373 = vmatpush1.bf16.msra.mxu0 %v2281
        %2374 = vmatprep.subr.bf16.mxu0 0
        %2375 = vmatpush1.bf16.msra.mxu0 %v2280
        %2376 = vmatprep.subr.bf16.mxu0 0
        %2377 = vmatpush1.bf16.msra.mxu0 %v2279
        %2378 = vmatprep.subr.bf16.mxu0 0
        %2379 = vmatpush2.bf16.msra.mxu0 0
        %2380 = vmatprep.subr.bf16.mxu0 0
        %2381 = vmatpush2.bf16.msra.mxu0 0
        %2382 = vmatprep.subr.bf16.mxu0 0
        %2383 = vmatpush2.bf16.msra.mxu0 0
        %2384 = vmatprep.subr.bf16.mxu0 0
        %2385 = vmatpush2.bf16.msra.mxu0 0
        %2386 = vmatprep.subr.bf16.mxu0 0
        %2387 = vmatpush2.bf16.msra.mxu0 %v2290
        %2388 = vmatprep.subr.bf16.mxu0 0
        %2389 = vmatpush2.bf16.msra.mxu0 %v2289
        %2390 = vmatprep.subr.bf16.mxu0 0
        %2391 = vmatpush2.bf16.msra.mxu0 %v2288
        %2392 = vmatprep.subr.bf16.mxu0 0
        %2393 = vmatpush2.bf16.msra.mxu0 %v2287
        %2394 = vmatprep.mubr.bf16.mxu0 %v2320
        %2395 = vmatmul.mubr.bf16.gmra.mxu0 %v2144
        %v2396 = vpop.f32.mrf.mxu0
        %v2397 = vadd.f32 %v2357, %v2396
        %v2398 = vpop.f32.mrf.mxu0
        %v2399 = vpop.f32.mrf.mxu0
        %v2400 = vpop.f32.mrf.mxu0
        %2401 = vdwg.mxu0
        %v2402 = vadd.f32 %v2078, %v2397
        %v2403 = vld [vmem:[%s4] sm:$0x1]
        %v2405 = vlaneseq
        %v2406 = vshrl.u32 %v2405, 7
        %v2407 = vsub.s32 0, %v2406
        %v2408 = vrot.slane %v2403, %v2407
        %v2410 = vadd.f32 %v2402, %v2408
        %v2411 = vmax.f32 %v2410, 0.0
        %v2412 = vld [vmem:[%s5] sm:$0xf]
        %v2413 = vld [vmem:[%s5 + $0x4] sm:$0xf]
        %v2414 = vld [vmem:[%s5 + $0x8] sm:$0xf]
        %v2415 = vld [vmem:[%s5 + $0xc] sm:$0xf]
        %v2416 = vld [vmem:[%s5 + $0x10] sm:$0xf]
        %v2417 = vld [vmem:[%s5 + $0x14] sm:$0xf]
        %v2418 = vld [vmem:[%s5 + $0x18] sm:$0xf]
        %v2419 = vld [vmem:[%s5 + $0x1c] sm:$0xf]
        %v2420 = vld [vmem:[%s5 + $0x20] sm:$0xf]
        %v2421 = vld [vmem:[%s5 + $0x24] sm:$0xf]
        %v2422 = vld [vmem:[%s5 + $0x28] sm:$0xf]
        %v2423 = vld [vmem:[%s5 + $0x2c] sm:$0xf]
        %v2424 = vld [vmem:[%s5 + $0x30] sm:$0xf]
        %v2425 = vld [vmem:[%s5 + $0x34] sm:$0xf]
        %v2426 = vld [vmem:[%s5 + $0x38] sm:$0xf]
        %v2427 = vld [vmem:[%s5 + $0x3c] sm:$0xf]
        %v2428 = vld [vmem:[%s5 + $0x40] sm:$0xf]
        %v2429 = vld [vmem:[%s5 + $0x44] sm:$0xf]
        %v2430 = vld [vmem:[%s5 + $0x48] sm:$0xf]
        %v2431 = vld [vmem:[%s5 + $0x4c] sm:$0xf]
        %v2432 = vld [vmem:[%s5 + $0x50] sm:$0xf]
        %v2433 = vld [vmem:[%s5 + $0x54] sm:$0xf]
        %v2434 = vld [vmem:[%s5 + $0x58] sm:$0xf]
        %v2435 = vld [vmem:[%s5 + $0x5c] sm:$0xf]
        %v2436 = vld [vmem:[%s5 + $0x60] sm:$0xf]
        %v2437 = vld [vmem:[%s5 + $0x64] sm:$0xf]
        %v2438 = vld [vmem:[%s5 + $0x68] sm:$0xf]
        %v2439 = vld [vmem:[%s5 + $0x6c] sm:$0xf]
        %v2440 = vld [vmem:[%s5 + $0x70] sm:$0xf]
        %v2441 = vld [vmem:[%s5 + $0x74] sm:$0xf]
        %v2442 = vld [vmem:[%s5 + $0x78] sm:$0xf]
        %v2443 = vld [vmem:[%s5 + $0x7c] sm:$0xf]
        %v2444 = vld [vmem:[%s5 + $0x80] sm:$0xf]
        %v2445 = vld [vmem:[%s5 + $0x84] sm:$0xf]
        %v2446 = vld [vmem:[%s5 + $0x88] sm:$0xf]
        %v2447 = vld [vmem:[%s5 + $0x8c] sm:$0xf]
        %v2448 = vld [vmem:[%s5 + $0x90] sm:$0xf]
        %v2449 = vld [vmem:[%s5 + $0x94] sm:$0xf]
        %v2450 = vld [vmem:[%s5 + $0x98] sm:$0xf]
        %v2451 = vld [vmem:[%s5 + $0x9c] sm:$0xf]
        %v2452 = vld [vmem:[%s5 + $0xa0] sm:$0xf]
        %v2453 = vld [vmem:[%s5 + $0xa4] sm:$0xf]
        %v2454 = vld [vmem:[%s5 + $0xa8] sm:$0xf]
        %v2455 = vld [vmem:[%s5 + $0xac] sm:$0xf]
        %v2456 = vld [vmem:[%s5 + $0xb0] sm:$0xf]
        %v2457 = vld [vmem:[%s5 + $0xb4] sm:$0xf]
        %v2458 = vld [vmem:[%s5 + $0xb8] sm:$0xf]
        %v2459 = vld [vmem:[%s5 + $0xbc] sm:$0xf]
        %v2460 = vld [vmem:[%s5 + $0xc0] sm:$0xf]
        %v2461 = vld [vmem:[%s5 + $0xc4] sm:$0xf]
        %v2462 = vld [vmem:[%s5 + $0xc8] sm:$0xf]
        %v2463 = vld [vmem:[%s5 + $0xcc] sm:$0xf]
        %v2464 = vld [vmem:[%s5 + $0xd0] sm:$0xf]
        %v2465 = vld [vmem:[%s5 + $0xd4] sm:$0xf]
        %v2466 = vld [vmem:[%s5 + $0xd8] sm:$0xf]
        %v2467 = vld [vmem:[%s5 + $0xdc] sm:$0xf]
        %v2468 = vld [vmem:[%s5 + $0xe0] sm:$0xf]
        %v2469 = vld [vmem:[%s5 + $0xe4] sm:$0xf]
        %v2470 = vld [vmem:[%s5 + $0xe8] sm:$0xf]
        %v2471 = vld [vmem:[%s5 + $0xec] sm:$0xf]
        %v2472 = vld [vmem:[%s5 + $0xf0] sm:$0xf]
        %v2473 = vld [vmem:[%s5 + $0xf4] sm:$0xf]
        %v2474 = vld [vmem:[%s5 + $0xf8] sm:$0xf]
        %v2475 = vld [vmem:[%s5 + $0xfc] sm:$0xf]
        %v2476 = vpack.c.bf16 %v2411, %v2411
        %v2478 = vshrl.u32 %v2476, 16
        %v2497 = vunpack.c.l.b16 %v2428
        %v2498 = vunpack.c.l.b16 %v2429
        %v2499 = vunpack.c.l.b16 %v2430
        %v2500 = vunpack.c.l.b16 %v2431
        %v2501 = vunpack.c.l.b16 %v2432
        %v2502 = vunpack.c.l.b16 %v2433
        %v2503 = vunpack.c.l.b16 %v2434
        %v2504 = vunpack.c.l.b16 %v2435
        %v2505 = vunpack.c.l.b16 %v2436
        %v2506 = vunpack.c.l.b16 %v2437
        %v2507 = vunpack.c.l.b16 %v2438
        %v2508 = vunpack.c.l.b16 %v2439
        %v2509 = vunpack.c.l.b16 %v2440
        %v2510 = vunpack.c.l.b16 %v2441
        %v2511 = vunpack.c.l.b16 %v2442
        %v2512 = vunpack.c.l.b16 %v2443
        %v2513 = vpack.c.b16 %v2498, %v2497
        %v2514 = vpack.c.b16 %v2500, %v2499
        %v2515 = vpack.c.b16 %v2502, %v2501
        %v2516 = vpack.c.b16 %v2504, %v2503
        %v2517 = vpack.c.b16 %v2506, %v2505
        %v2518 = vpack.c.b16 %v2508, %v2507
        %v2519 = vpack.c.b16 %v2510, %v2509
        %v2520 = vpack.c.b16 %v2512, %v2511
        %2529 = vmatprep.subr.bf16.mxu0 0
        %2530 = vmatpush1.bf16.msra.mxu0 %v2520
        %2531 = vmatprep.subr.bf16.mxu0 0
        %2532 = vmatpush1.bf16.msra.mxu0 %v2519
        %2533 = vmatprep.subr.bf16.mxu0 0
        %2534 = vmatpush1.bf16.msra.mxu0 %v2518
        %2535 = vmatprep.subr.bf16.mxu0 0
        %2536 = vmatpush1.bf16.msra.mxu0 %v2517
        %2537 = vmatprep.subr.bf16.mxu0 0
        %2538 = vmatpush1.bf16.msra.mxu0 %v2516
        %2539 = vmatprep.subr.bf16.mxu0 0
        %2540 = vmatpush1.bf16.msra.mxu0 %v2515
        %2541 = vmatprep.subr.bf16.mxu0 0
        %2542 = vmatpush1.bf16.msra.mxu0 %v2514
        %2543 = vmatprep.subr.bf16.mxu0 0
        %2544 = vmatpush1.bf16.msra.mxu0 %v2513
        %2545 = vmatprep.subr.bf16.mxu0 0
        %2546 = vmatpush2.bf16.msra.mxu0 0
        %2547 = vmatprep.subr.bf16.mxu0 0
        %2548 = vmatpush2.bf16.msra.mxu0 0
        %2549 = vmatprep.subr.bf16.mxu0 0
        %2550 = vmatpush2.bf16.msra.mxu0 0
        %2551 = vmatprep.subr.bf16.mxu0 0
        %2552 = vmatpush2.bf16.msra.mxu0 0
        %2553 = vmatprep.subr.bf16.mxu0 0
        %2554 = vmatpush2.bf16.msra.mxu0 0
        %2555 = vmatprep.subr.bf16.mxu0 0
        %2556 = vmatpush2.bf16.msra.mxu0 0
        %2557 = vmatprep.subr.bf16.mxu0 0
        %2558 = vmatpush2.bf16.msra.mxu0 0
        %2559 = vmatprep.subr.bf16.mxu0 0
        %2560 = vmatpush2.bf16.msra.mxu0 0
        %2561 = vmatprep.mubr.bf16.mxu0 0
        %2562 = vmatmul.mubr.bf16.gmra.mxu0 %v2478
        %v2563 = vpop.f32.mrf.mxu0
        %v2564 = vadd.f32 0.0, %v2563
        %v2565 = vpop.f32.mrf.mxu0
        %v2566 = vpop.f32.mrf.mxu0
        %v2567 = vpop.f32.mrf.mxu0
        %2568 = vdwg.mxu0
        %v2585 = vunpack.c.l.b16 %v2412
        %v2586 = vunpack.c.l.b16 %v2413
        %v2587 = vunpack.c.l.b16 %v2414
        %v2588 = vunpack.c.l.b16 %v2415
        %v2589 = vunpack.c.l.b16 %v2416
        %v2590 = vunpack.c.l.b16 %v2417
        %v2591 = vunpack.c.l.b16 %v2418
        %v2592 = vunpack.c.l.b16 %v2419
        %v2593 = vunpack.c.l.b16 %v2420
        %v2594 = vunpack.c.l.b16 %v2421
        %v2595 = vunpack.c.l.b16 %v2422
        %v2596 = vunpack.c.l.b16 %v2423
        %v2597 = vunpack.c.l.b16 %v2424
        %v2598 = vunpack.c.l.b16 %v2425
        %v2599 = vunpack.c.l.b16 %v2426
        %v2600 = vunpack.c.l.b16 %v2427
        %v2601 = vpack.c.b16 %v2586, %v2585
        %v2602 = vpack.c.b16 %v2588, %v2587
        %v2603 = vpack.c.b16 %v2590, %v2589
        %v2604 = vpack.c.b16 %v2592, %v2591
        %v2605 = vpack.c.b16 %v2594, %v2593
        %v2606 = vpack.c.b16 %v2596, %v2595
        %v2607 = vpack.c.b16 %v2598, %v2597
        %v2608 = vpack.c.b16 %v2600, %v2599
        %2617 = vmatprep.subr.bf16.mxu0 0
        %2618 = vmatpush1.bf16.msra.mxu0 %v2608
        %2619 = vmatprep.subr.bf16.mxu0 0
        %2620 = vmatpush1.bf16.msra.mxu0 %v2607
        %2621 = vmatprep.subr.bf16.mxu0 0
        %2622 = vmatpush1.bf16.msra.mxu0 %v2606
        %2623 = vmatprep.subr.bf16.mxu0 0
        %2624 = vmatpush1.bf16.msra.mxu0 %v2605
        %2625 = vmatprep.subr.bf16.mxu0 0
        %2626 = vmatpush1.bf16.msra.mxu0 %v2604
        %2627 = vmatprep.subr.bf16.mxu0 0
        %2628 = vmatpush1.bf16.msra.mxu0 %v2603
        %2629 = vmatprep.subr.bf16.mxu0 0
        %2630 = vmatpush1.bf16.msra.mxu0 %v2602
        %2631 = vmatprep.subr.bf16.mxu0 0
        %2632 = vmatpush1.bf16.msra.mxu0 %v2601
        %2633 = vmatprep.subr.bf16.mxu0 0
        %2634 = vmatpush2.bf16.msra.mxu0 0
        %2635 = vmatprep.subr.bf16.mxu0 0
        %2636 = vmatpush2.bf16.msra.mxu0 0
        %2637 = vmatprep.subr.bf16.mxu0 0
        %2638 = vmatpush2.bf16.msra.mxu0 0
        %2639 = vmatprep.subr.bf16.mxu0 0
        %2640 = vmatpush2.bf16.msra.mxu0 0
        %2641 = vmatprep.subr.bf16.mxu0 0
        %2642 = vmatpush2.bf16.msra.mxu0 0
        %2643 = vmatprep.subr.bf16.mxu0 0
        %2644 = vmatpush2.bf16.msra.mxu0 0
        %2645 = vmatprep.subr.bf16.mxu0 0
        %2646 = vmatpush2.bf16.msra.mxu0 0
        %2647 = vmatprep.subr.bf16.mxu0 0
        %2648 = vmatpush2.bf16.msra.mxu0 0
        %2649 = vmatprep.mubr.bf16.mxu0 0
        %2650 = vmatmul.mubr.bf16.gmra.mxu0 %v2476
        %v2651 = vpop.f32.mrf.mxu0
        %v2652 = vadd.f32 %v2564, %v2651
        %v2653 = vpop.f32.mrf.mxu0
        %v2654 = vpop.f32.mrf.mxu0
        %v2655 = vpop.f32.mrf.mxu0
        %2656 = vdwg.mxu0
        %v2658 = vrot.slane %v2476, 1
        %v2676 = vunpack.c.l.b16 %v2444
        %v2677 = vunpack.c.l.b16 %v2445
        %v2678 = vunpack.c.l.b16 %v2446
        %v2679 = vunpack.c.l.b16 %v2447
        %v2680 = vunpack.c.l.b16 %v2448
        %v2681 = vunpack.c.l.b16 %v2449
        %v2682 = vunpack.c.l.b16 %v2450
        %v2683 = vunpack.c.l.b16 %v2451
        %v2684 = vunpack.c.l.b16 %v2452
        %v2685 = vunpack.c.l.b16 %v2453
        %v2686 = vunpack.c.l.b16 %v2454
        %v2687 = vunpack.c.l.b16 %v2455
        %v2688 = vunpack.c.l.b16 %v2456
        %v2689 = vunpack.c.l.b16 %v2457
        %v2690 = vunpack.c.l.b16 %v2458
        %v2691 = vunpack.c.l.b16 %v2459
        %v2692 = vpack.c.b16 %v2677, %v2676
        %v2693 = vpack.c.b16 %v2679, %v2678
        %v2694 = vpack.c.b16 %v2681, %v2680
        %v2695 = vpack.c.b16 %v2683, %v2682
        %v2696 = vpack.c.b16 %v2685, %v2684
        %v2697 = vpack.c.b16 %v2687, %v2686
        %v2698 = vpack.c.b16 %v2689, %v2688
        %v2699 = vpack.c.b16 %v2691, %v2690
        %2708 = vmatprep.subr.bf16.mxu0 0
        %2709 = vmatpush1.bf16.msra.mxu0 %v2699
        %2710 = vmatprep.subr.bf16.mxu0 0
        %2711 = vmatpush1.bf16.msra.mxu0 %v2698
        %2712 = vmatprep.subr.bf16.mxu0 0
        %2713 = vmatpush1.bf16.msra.mxu0 %v2697
        %2714 = vmatprep.subr.bf16.mxu0 0
        %2715 = vmatpush1.bf16.msra.mxu0 %v2696
        %2716 = vmatprep.subr.bf16.mxu0 0
        %2717 = vmatpush1.bf16.msra.mxu0 %v2695
        %2718 = vmatprep.subr.bf16.mxu0 0
        %2719 = vmatpush1.bf16.msra.mxu0 %v2694
        %2720 = vmatprep.subr.bf16.mxu0 0
        %2721 = vmatpush1.bf16.msra.mxu0 %v2693
        %2722 = vmatprep.subr.bf16.mxu0 0
        %2723 = vmatpush1.bf16.msra.mxu0 %v2692
        %2724 = vmatprep.subr.bf16.mxu0 0
        %2725 = vmatpush2.bf16.msra.mxu0 0
        %2726 = vmatprep.subr.bf16.mxu0 0
        %2727 = vmatpush2.bf16.msra.mxu0 0
        %2728 = vmatprep.subr.bf16.mxu0 0
        %2729 = vmatpush2.bf16.msra.mxu0 0
        %2730 = vmatprep.subr.bf16.mxu0 0
        %2731 = vmatpush2.bf16.msra.mxu0 0
        %2732 = vmatprep.subr.bf16.mxu0 0
        %2733 = vmatpush2.bf16.msra.mxu0 0
        %2734 = vmatprep.subr.bf16.mxu0 0
        %2735 = vmatpush2.bf16.msra.mxu0 0
        %2736 = vmatprep.subr.bf16.mxu0 0
        %2737 = vmatpush2.bf16.msra.mxu0 0
        %2738 = vmatprep.subr.bf16.mxu0 0
        %2739 = vmatpush2.bf16.msra.mxu0 0
        %2740 = vmatprep.mubr.bf16.mxu0 0
        %2741 = vmatmul.mubr.bf16.gmra.mxu0 %v2658
        %v2742 = vpop.f32.mrf.mxu0
        %v2743 = vadd.f32 0.0, %v2742
        %v2744 = vpop.f32.mrf.mxu0
        %v2745 = vpop.f32.mrf.mxu0
        %v2746 = vpop.f32.mrf.mxu0
        %2747 = vdwg.mxu0
        %v2748 = vadd.f32 %v2652, %v2743
        %v2749 = vrot.slane %v2478, 1
        %v2767 = vunpack.c.l.b16 %v2460
        %v2768 = vunpack.c.l.b16 %v2461
        %v2769 = vunpack.c.l.b16 %v2462
        %v2770 = vunpack.c.l.b16 %v2463
        %v2771 = vunpack.c.l.b16 %v2464
        %v2772 = vunpack.c.l.b16 %v2465
        %v2773 = vunpack.c.l.b16 %v2466
        %v2774 = vunpack.c.l.b16 %v2467
        %v2775 = vunpack.c.l.b16 %v2468
        %v2776 = vunpack.c.l.b16 %v2469
        %v2777 = vunpack.c.l.b16 %v2470
        %v2778 = vunpack.c.l.b16 %v2471
        %v2779 = vunpack.c.l.b16 %v2472
        %v2780 = vunpack.c.l.b16 %v2473
        %v2781 = vunpack.c.l.b16 %v2474
        %v2782 = vunpack.c.l.b16 %v2475
        %v2783 = vpack.c.b16 %v2768, %v2767
        %v2784 = vpack.c.b16 %v2770, %v2769
        %v2785 = vpack.c.b16 %v2772, %v2771
        %v2786 = vpack.c.b16 %v2774, %v2773
        %v2787 = vpack.c.b16 %v2776, %v2775
        %v2788 = vpack.c.b16 %v2778, %v2777
        %v2789 = vpack.c.b16 %v2780, %v2779
        %v2790 = vpack.c.b16 %v2782, %v2781
        %2799 = vmatprep.subr.bf16.mxu0 0
        %2800 = vmatpush1.bf16.msra.mxu0 %v2790
        %2801 = vmatprep.subr.bf16.mxu0 0
        %2802 = vmatpush1.bf16.msra.mxu0 %v2789
        %2803 = vmatprep.subr.bf16.mxu0 0
        %2804 = vmatpush1.bf16.msra.mxu0 %v2788
        %2805 = vmatprep.subr.bf16.mxu0 0
        %2806 = vmatpush1.bf16.msra.mxu0 %v2787
        %2807 = vmatprep.subr.bf16.mxu0 0
        %2808 = vmatpush1.bf16.msra.mxu0 %v2786
        %2809 = vmatprep.subr.bf16.mxu0 0
        %2810 = vmatpush1.bf16.msra.mxu0 %v2785
        %2811 = vmatprep.subr.bf16.mxu0 0
        %2812 = vmatpush1.bf16.msra.mxu0 %v2784
        %2813 = vmatprep.subr.bf16.mxu0 0
        %2814 = vmatpush1.bf16.msra.mxu0 %v2783
        %2815 = vmatprep.subr.bf16.mxu0 0
        %2816 = vmatpush2.bf16.msra.mxu0 0
        %2817 = vmatprep.subr.bf16.mxu0 0
        %2818 = vmatpush2.bf16.msra.mxu0 0
        %2819 = vmatprep.subr.bf16.mxu0 0
        %2820 = vmatpush2.bf16.msra.mxu0 0
        %2821 = vmatprep.subr.bf16.mxu0 0
        %2822 = vmatpush2.bf16.msra.mxu0 0
        %2823 = vmatprep.subr.bf16.mxu0 0
        %2824 = vmatpush2.bf16.msra.mxu0 0
        %2825 = vmatprep.subr.bf16.mxu0 0
        %2826 = vmatpush2.bf16.msra.mxu0 0
        %2827 = vmatprep.subr.bf16.mxu0 0
        %2828 = vmatpush2.bf16.msra.mxu0 0
        %2829 = vmatprep.subr.bf16.mxu0 0
        %2830 = vmatpush2.bf16.msra.mxu0 0
        %2831 = vmatprep.mubr.bf16.mxu0 0
        %2832 = vmatmul.mubr.bf16.gmra.mxu0 %v2749
        %v2833 = vpop.f32.mrf.mxu0
        %v2834 = vadd.f32 0.0, %v2833
        %v2835 = vpop.f32.mrf.mxu0
        %v2836 = vpop.f32.mrf.mxu0
        %v2837 = vpop.f32.mrf.mxu0
        %2838 = vdwg.mxu0
        %v2839 = vadd.f32 %v2748, %v2834
        %v2840 = vld [vmem:[%s6] sm:$0x1]
        %v2841 = vadd.f32 %v2839, %v2840
        %v2842 = vmax.f32 %v2841, 0.0
        %vm2843 = vcmask 122880
        %2844 = vst.msk [vmem:[%s413] sm:$0x1] %vm2843, %v2842
        %v2845 = vpack.c.bf16 %v2842, %v2842
        %v2846 = vld [vmem:[%s7] sm:$0xf]
        %v2847 = vld [vmem:[%s7 + $0x4] sm:$0xf]
        %v2848 = vld [vmem:[%s8] sm:$0x1]
        %v2851 = vunpack.c.l.b16 %v2846
        %v2852 = vunpack.c.l.b16 %v2847
        %v2853 = vpack.c.b16 %v2852, %v2851
        %vm2855 = vcmask 130048
        %v2857 = vsel %vm2855, %v2845, 0
        %2859 = vmatprep.subr.bf16.mxu0 0
        %2860 = vmatpush1.bf16.msra.mxu0 0
        %2861 = vmatprep.subr.bf16.mxu0 0
        %2862 = vmatpush1.bf16.msra.mxu0 0
        %2863 = vmatprep.subr.bf16.mxu0 0
        %2864 = vmatpush1.bf16.msra.mxu0 0
        %2865 = vmatprep.subr.bf16.mxu0 0
        %2866 = vmatpush1.bf16.msra.mxu0 0
        %2867 = vmatprep.subr.bf16.mxu0 0
        %2868 = vmatpush1.bf16.msra.mxu0 0
        %2869 = vmatprep.subr.bf16.mxu0 0
        %2870 = vmatpush1.bf16.msra.mxu0 0
        %2871 = vmatprep.subr.bf16.mxu0 0
        %2872 = vmatpush1.bf16.msra.mxu0 0
        %2873 = vmatprep.subr.bf16.mxu0 0
        %2874 = vmatpush1.bf16.msra.mxu0 %v2853
        %2875 = vmatprep.subr.bf16.mxu0 0
        %2876 = vmatpush2.bf16.msra.mxu0 0
        %2877 = vmatprep.subr.bf16.mxu0 0
        %2878 = vmatpush2.bf16.msra.mxu0 0
        %2879 = vmatprep.subr.bf16.mxu0 0
        %2880 = vmatpush2.bf16.msra.mxu0 0
        %2881 = vmatprep.subr.bf16.mxu0 0
        %2882 = vmatpush2.bf16.msra.mxu0 0
        %2883 = vmatprep.subr.bf16.mxu0 0
        %2884 = vmatpush2.bf16.msra.mxu0 0
        %2885 = vmatprep.subr.bf16.mxu0 0
        %2886 = vmatpush2.bf16.msra.mxu0 0
        %2887 = vmatprep.subr.bf16.mxu0 0
        %2888 = vmatpush2.bf16.msra.mxu0 0
        %2889 = vmatprep.subr.bf16.mxu0 0
        %2890 = vmatpush2.bf16.msra.mxu0 0
        %2891 = vmatprep.mubr.bf16.mxu0 0
        %2892 = vmatmul.mubr.bf16.gmra.mxu0 %v2857
        %v2893 = vpop.f32.mrf.mxu0
        %v2894 = vadd.f32 %v2848, %v2893
        %v2895 = vpop.f32.mrf.mxu0
        %v2896 = vpop.f32.mrf.mxu0
        %v2897 = vpop.f32.mrf.mxu0
        %2898 = vdwg.mxu0
        %v2899 = vmax.f32 %v2894, 0.0
        %v2900 = vld [vmem:[%s9] sm:$0x1]
        %v2901 = vunpack.c.l.bf16 %v2900
        %v2902 = vmul.f32 %v2899, %v2901
        %vm2903 = vcmask 253952
        %v2904 = vsel %vm2903, %v2902, 0.0
        %2905 = vadd.xlane.f32.xlu0 %v2904
        %v2906 = vpop.xlane.xlu0 %2905
        %v2907 = vld [vmem:[#allocation2] sm:$0x1]
        %v2908 = vadd.f32 %v2906, %v2907
        %v2909 = vxor.u32 %v2908, 2147483648
        %v2910 = vmul.f32 %v2909, 1.442695
        %v2911 = vpow.pop %v2910
        %v2912 = vadd.f32 %v2911, 1.0
        %v2913 = vrcp.pop %v2912
        %v2914 = vmul.f32 1.0, %v2913
        %vm2915 = vcmask 0
        %2916 = vst.msk [vmem:[%s421] sm:$0x1] %vm2915, %v2914
        %p2917 = scmp.lt.s32.totalorder %s29, 1
        %s2918 = scalar_select %p2917, %s29, 1
        %s2919 = scalar_lea.vmem %s11, %s2918
        %s2920 = sand.u32 %s299, 1
        %s2921 = scalar_lea.sflag [#allocation4], %s2920
        %s2922 = sand.u32 %s299, 1
        %s2923 = scalar_lea.vmem [#allocation3], %s2922
        // Predicated region
        $region65: #{discriminator_forward.1} parent=63 // pred_check
          %p2924 = pneg %p283
        $region66: #{discriminator_forward.1} parent=63 // pred_check_branch
          %2926 = sbr.rel (%p2924) target = $region68
        $region67: #{discriminator_forward.1} parent=63 // pred_region
          _
        $region68: #{discriminator_forward.1} parent=63 // pred_fallthru
          _
        // Predicated region
        $region69: #{discriminator_forward.1} parent=63 // pred_check
          %p2927 = pneg %p309
        $region70: #{discriminator_forward.1} parent=63 // pred_check_branch
          %2929 = sbr.rel (%p2927) target = $region72
        $region71: #{discriminator_forward.1} parent=63 // pred_region
          %s2931 = ssub.s32 16, 16
          %2932 = vsyncadd %s2921, %s2931
          %s2933 = smul.addr %s29, 16
          %s2934 = scalar_lea.hbm %s12, %s2933
          %s2936 = sshll.u32 %s2923, 4
          %s2937 = int_to_ptr.vmem [resolvable:$true] %s2936
          %2939 = dma.vmem_to_hbm [thread:$0]  %s2937, 16, %s2934, %s2921
        $region72: #{discriminator_forward.1} parent=63 // pred_fallthru
          _
      $region64: #{discriminator_forward.1} parent=5 // pred_fallthru
        _
      %p2940 = scmp.le.s32.totalorder 2, %s24
      // Predicated region
      $region73: #{discriminator_forward.1} parent=5 // pred_check
        %p2941 = pneg %p2940
      $region74: #{discriminator_forward.1} parent=5 // pred_check_branch
        %2943 = sbr.rel (%p2941) target = $region76
      $region75: #{discriminator_forward.1} parent=5 // pred_region
        %s2944 = ssub.s32 %s24, 2
        // Predicated region
        $region77: #{discriminator_forward.1} parent=75 // pred_check
          %p2945 = pneg %p289
        $region78: #{discriminator_forward.1} parent=75 // pred_check_branch
          %2947 = sbr.rel (%p2945) target = $region80
        $region79: #{discriminator_forward.1} parent=75 // pred_region
          %p2948 = scmp.lt.s32.totalorder %s30, 1
          %s2949 = scalar_select %p2948, %s30, 1
          %s2950 = scalar_lea.vmem %s11, %s2949
        $region80: #{discriminator_forward.1} parent=75 // pred_fallthru
          _
        // Predicated region
        $region81: #{discriminator_forward.1} parent=75 // pred_check
          %p2951 = pneg %p315
        $region82: #{discriminator_forward.1} parent=75 // pred_check_branch
          %2953 = sbr.rel (%p2951) target = $region84
        $region83: #{discriminator_forward.1} parent=75 // pred_region
          %s2954 = sand.u32 %s300, 1
          %s2955 = scalar_lea.sflag [#allocation4], %s2954
          %s2956 = sand.u32 %s300, 1
          %s2957 = scalar_lea.vmem [#allocation3], %s2956
          %2958 = dma.done %s2955, 16
        $region84: #{discriminator_forward.1} parent=75 // pred_fallthru
          _
      $region76: #{discriminator_forward.1} parent=5 // pred_fallthru
        _
    $region6: #{discriminator_forward.1} parent=1 // loop_footer
      %s28 = sadd.s32 1, %s24
    $region7: #{discriminator_forward.1} parent=1 // loop_footer_branch
      %23 = sbr.rel target = $region3
    $region8: #{discriminator_forward.1} parent=1 // loop_exit
      _
    %2959 = vsyncpa [#allocation4], 1
    %s2960 = scalar_lea.sflag [#allocation4], 1
    %2961 = vsyncpa %s2960, 1

</llo_original>
